<compile_context>
chip_gen: v5e
topology: v5e:2x2
jax: 0.10.0
libtpu: 0.0.40
codegen_flags: <defaults>
</compile_context>

<pallas_src>
import functools
import math

import jax
import jax.numpy as jnp
from jax import lax
from jax.experimental import pallas as pl


# --------------------------------------------------------------------------
# Fused MHA Pallas kernel (projections + attention + output projection)
# --------------------------------------------------------------------------
def mha_fused_kernel(q_ref, k_ref, v_ref,
                     wq_ref, wk_ref, wv_ref, wo_ref,
                     bq_ref, bk_ref, bv_ref, bo_ref,
                     mask_ref, out_ref, *, nhead, batch, seq, mxu_dtype):
    # q_ref/k_ref/v_ref : (bs*S, D)  — whole flattened batch, resident in VMEM
    # w*_ref            : (D, D)
    # b*_ref            : (1, D)
    # mask_ref          : (bs, S, S) int32 (0 = masked), DMA'd once
    # out_ref           : (bs*S, D)  — final projected output slab
    d_model = q_ref.shape[1]
    d_k = d_model // nhead
    inv_sqrt_dk = jnp.float32(1.0 / math.sqrt(d_k))
    neg_big = jnp.float32(-1000000000.0)

    # Load weights/inputs once (single invocation — no pipelining needed).
    wq = wq_ref[...].astype(mxu_dtype)
    wk = wk_ref[...].astype(mxu_dtype)
    wv = wv_ref[...].astype(mxu_dtype)
    wo = wo_ref[...].astype(mxu_dtype)
    x_q = q_ref[...].astype(mxu_dtype)          # (T, D), T = bs*S
    x_k = k_ref[...].astype(mxu_dtype)
    x_v = v_ref[...].astype(mxu_dtype)

    # Full-width projections for the whole flattened batch (heads folded into
    # the MXU N dimension, batch folded onto sublanes).  Scale folded into Q.
    qp = (jnp.dot(x_q, wq, preferred_element_type=jnp.float32)
          + bq_ref[...]) * inv_sqrt_dk                                   # (T, D) f32
    kp = jnp.dot(x_k, wk, preferred_element_type=jnp.float32) + bk_ref[...]
    vp = jnp.dot(x_v, wv, preferred_element_type=jnp.float32) + bv_ref[...]

    for b in range(batch):                       # static unroll (tiny batch)
        r0 = b * seq                             # sublane-aligned row offset
        maskb = mask_ref[b] == 0                 # (S, S) bool, True = masked out

        acc = None                               # (S, D) f32 output-projection acc
        for h in range(nhead):                   # static unroll over heads
            lo = h * d_k
            qh = qp[r0:r0 + seq, lo:lo + d_k]    # (S, d_k) static slices
            kh = kp[r0:r0 + seq, lo:lo + d_k]
            vh = vp[r0:r0 + seq, lo:lo + d_k]

            # scores = qh @ kh^T without materializing a transpose.
            scores = lax.dot_general(qh.astype(mxu_dtype), kh.astype(mxu_dtype),
                                     (((1,), (1,)), ((), ())),
                                     preferred_element_type=jnp.float32)  # (S, S)
            scores = jnp.where(maskb, neg_big, scores)

            # Numerically-stable softmax, deferred normalization (f32 math).
            m = jnp.max(scores, axis=-1, keepdims=True)
            e = jnp.exp(scores - m)                                       # (S, S)
            s = jnp.sum(e, axis=-1, keepdims=True)                        # (S, 1)
            o = jnp.dot(e.astype(mxu_dtype), vh.astype(mxu_dtype),
                        preferred_element_type=jnp.float32)               # (S, d_k)
            o = o * pl.reciprocal(s, approx=True)                         # EUP vrcp

            # Fused output projection, accumulated per head — no lane concat,
            # no simultaneously-live per-head outputs.
            contrib = jnp.dot(o.astype(mxu_dtype), wo[lo:lo + d_k, :],
                              preferred_element_type=jnp.float32)         # (S, D)
            acc = contrib if acc is None else acc + contrib

        out_ref[r0:r0 + seq, :] = (acc + bo_ref[...]).astype(out_ref.dtype)


# --------------------------------------------------------------------------
# Wrapper
# --------------------------------------------------------------------------
def multi_head_attention(q, k, v, mask, params, nhead, mxu_dtype=jnp.float32):
    """q, k, v: (bs, S, d_model) float32; mask: (bs, S, S) int (0 = masked).

    Set mxu_dtype=jnp.bfloat16 on v6e/v7x for bf16 MXU operands (softmax math
    stays f32); requires relaxing the comparison tolerance accordingly.
    """
    bs, S, d_model = q.shape
    T = bs * S

    # Flatten batch onto the sublane axis; reshape is a free, contiguous view.
    q2 = q.reshape(T, d_model)
    k2 = k.reshape(T, d_model)
    v2 = v.reshape(T, d_model)

    kernel = functools.partial(mha_fused_kernel, nhead=nhead, batch=bs, seq=S,
                               mxu_dtype=mxu_dtype)

    # Single invocation (no grid): every operand gets a whole-array VMEM block,
    # DMA'd exactly once (no per-batch re-DMA of mask/weights, no double
    # buffering).  At these shapes everything fits comfortably in VMEM.
    out = pl.pallas_call(
        kernel,
        out_shape=jax.ShapeDtypeStruct((T, d_model), jnp.float32),
    )(q2, k2, v2,
      params["wq"], params["wk"], params["wv"], params["wo"],
      params["bq"].reshape(1, d_model), params["bk"].reshape(1, d_model),
      params["bv"].reshape(1, d_model), params["bo"].reshape(1, d_model),
      mask.astype(jnp.int32))

    return out.reshape(bs, S, d_model)


# --------------------------------------------------------------------------
# Pure-JAX reference (mirrors the PyTorch forward, eval-mode dropout)
# --------------------------------------------------------------------------
def reference_mha(q, k, v, mask, params, nhead):
    bs, S, d_model = q.shape
    d_k = d_model // nhead
    qp = q @ params["wq"] + params["bq"]
    kp = k @ params["wk"] + params["bk"]
    vp = v @ params["wv"] + params["bv"]
    qh = qp.reshape(bs, S, nhead, d_k).transpose(0, 2, 1, 3)
    kh = kp.reshape(bs, S, nhead, d_k).transpose(0, 2, 1, 3)
    vh = vp.reshape(bs, S, nhead, d_k).transpose(0, 2, 1, 3)
    scores = jnp.einsum("bhqd,bhkd->bhqk", qh, kh) / math.sqrt(d_k)
    scores = jnp.where(mask[:, None, :, :] == 0, -1000000000.0, scores)
    scores = jax.nn.softmax(scores, axis=-1)
    outh = jnp.einsum("bhqk,bhkd->bhqd", scores, vh)
    concat = outh.transpose(0, 2, 1, 3).reshape(bs, S, d_model)
    return concat @ params["wo"] + params["bo"]


# --------------------------------------------------------------------------
# Main
# --------------------------------------------------------------------------
if __name__ == "__main__":
    bs, S, d_model, nhead = 2, 8, 32, 4

    key = jax.random.PRNGKey(0)
    keys = jax.random.split(key, 12)

    scale = 1.0 / math.sqrt(d_model)
    params = {
        "wq": jax.random.uniform(keys[0], (d_model, d_model), jnp.float32, -scale, scale),
        "bq": jax.random.uniform(keys[1], (d_model,), jnp.float32, -scale, scale),
        "wk": jax.random.uniform(keys[2], (d_model, d_model), jnp.float32, -scale, scale),
        "bk": jax.random.uniform(keys[3], (d_model,), jnp.float32, -scale, scale),
        "wv": jax.random.uniform(keys[4], (d_model, d_model), jnp.float32, -scale, scale),
        "bv": jax.random.uniform(keys[5], (d_model,), jnp.float32, -scale, scale),
        "wo": jax.random.uniform(keys[6], (d_model, d_model), jnp.float32, -scale, scale),
        "bo": jax.random.uniform(keys[7], (d_model,), jnp.float32, -scale, scale),
    }

    q = jax.random.normal(keys[8], (bs, S, d_model), jnp.float32)
    k = jax.random.normal(keys[9], (bs, S, d_model), jnp.float32)
    v = jax.random.normal(keys[10], (bs, S, d_model), jnp.float32)

    # Causal mask, broadcast over batch (0 = masked position).  Kept as an
    # explicit input to preserve the module's arbitrary-mask semantics.
    mask = jnp.broadcast_to(
        jnp.tril(jnp.ones((S, S), jnp.int32)), (bs, S, S)
    ).astype(jnp.int32)

    out = multi_head_attention(q, k, v, mask, params, nhead)
    out = jax.block_until_ready(out)

    ref = reference_mha(q, k, v, mask, params, nhead)
    assert out.shape == (bs, S, d_model)
    # Tolerance covers the EUP approximate reciprocal (pl.reciprocal(approx=True));
    # all other math is f32.  A genuine implementation bug would be off by O(1).
    assert jnp.allclose(out, ref, atol=1e-3, rtol=1e-3), "Pallas output mismatch"

    print("KERNEL_OK")
</pallas_src>

<mosaic_0001>
module attributes {stable_mosaic.version = 11 : i64} {
  func.func @mha_fused_kernel(%arg0: memref<16x32xf32, #tpu.memory_space<vmem>>, %arg1: memref<16x32xf32, #tpu.memory_space<vmem>>, %arg2: memref<16x32xf32, #tpu.memory_space<vmem>>, %arg3: memref<32x32xf32, #tpu.memory_space<vmem>>, %arg4: memref<32x32xf32, #tpu.memory_space<vmem>>, %arg5: memref<32x32xf32, #tpu.memory_space<vmem>>, %arg6: memref<32x32xf32, #tpu.memory_space<vmem>>, %arg7: memref<1x32xf32, #tpu.memory_space<vmem>>, %arg8: memref<1x32xf32, #tpu.memory_space<vmem>>, %arg9: memref<1x32xf32, #tpu.memory_space<vmem>>, %arg10: memref<1x32xf32, #tpu.memory_space<vmem>>, %arg11: memref<2x8x8xi32, #tpu.memory_space<vmem>>, %arg12: memref<16x32xf32, #tpu.memory_space<vmem>>) attributes {dimension_semantics = [], scalar_prefetch = 0 : i64, scratch_operands = 0 : i64, tpu.core_type = #tpu.core_type<tc>} {
    %c0 = arith.constant 0 : index
    %c0_0 = arith.constant 0 : index
    %0 = vector.load %arg3[%c0, %c0_0] : memref<32x32xf32, #tpu.memory_space<vmem>>, vector<32x32xf32>
    %c0_1 = arith.constant 0 : index
    %c0_2 = arith.constant 0 : index
    %1 = vector.load %arg4[%c0_1, %c0_2] : memref<32x32xf32, #tpu.memory_space<vmem>>, vector<32x32xf32>
    %c0_3 = arith.constant 0 : index
    %c0_4 = arith.constant 0 : index
    %2 = vector.load %arg5[%c0_3, %c0_4] : memref<32x32xf32, #tpu.memory_space<vmem>>, vector<32x32xf32>
    %c0_5 = arith.constant 0 : index
    %c0_6 = arith.constant 0 : index
    %3 = vector.load %arg6[%c0_5, %c0_6] : memref<32x32xf32, #tpu.memory_space<vmem>>, vector<32x32xf32>
    %c0_7 = arith.constant 0 : index
    %c0_8 = arith.constant 0 : index
    %4 = vector.load %arg0[%c0_7, %c0_8] : memref<16x32xf32, #tpu.memory_space<vmem>>, vector<16x32xf32>
    %c0_9 = arith.constant 0 : index
    %c0_10 = arith.constant 0 : index
    %5 = vector.load %arg1[%c0_9, %c0_10] : memref<16x32xf32, #tpu.memory_space<vmem>>, vector<16x32xf32>
    %c0_11 = arith.constant 0 : index
    %c0_12 = arith.constant 0 : index
    %6 = vector.load %arg2[%c0_11, %c0_12] : memref<16x32xf32, #tpu.memory_space<vmem>>, vector<16x32xf32>
    %cst = arith.constant dense<0.000000e+00> : vector<16x32xf32>
    %7 = tpu.matmul %4, %0, %cst {dimension_numbers = #tpu.dot_dimension_numbers<[1], [0], [0], [1], [0, 0, 1, 1], [], []>} : vector<16x32xf32>, vector<32x32xf32>, vector<16x32xf32> -> vector<16x32xf32>
    %c0_13 = arith.constant 0 : index
    %c0_14 = arith.constant 0 : index
    %8 = vector.load %arg7[%c0_13, %c0_14] : memref<1x32xf32, #tpu.memory_space<vmem>>, vector<1x32xf32>
    %9 = vector.broadcast %8 : vector<1x32xf32> to vector<16x32xf32>
    %10 = arith.addf %7, %9 : vector<16x32xf32>
    %cst_15 = arith.constant 0.353553385 : f32
    %11 = vector.broadcast %cst_15 : f32 to vector<16x32xf32>
    %12 = arith.mulf %10, %11 : vector<16x32xf32>
    %cst_16 = arith.constant dense<0.000000e+00> : vector<16x32xf32>
    %13 = tpu.matmul %5, %1, %cst_16 {dimension_numbers = #tpu.dot_dimension_numbers<[1], [0], [0], [1], [0, 0, 1, 1], [], []>} : vector<16x32xf32>, vector<32x32xf32>, vector<16x32xf32> -> vector<16x32xf32>
    %c0_17 = arith.constant 0 : index
    %c0_18 = arith.constant 0 : index
    %14 = vector.load %arg8[%c0_17, %c0_18] : memref<1x32xf32, #tpu.memory_space<vmem>>, vector<1x32xf32>
    %15 = vector.broadcast %14 : vector<1x32xf32> to vector<16x32xf32>
    %16 = arith.addf %13, %15 : vector<16x32xf32>
    %cst_19 = arith.constant dense<0.000000e+00> : vector<16x32xf32>
    %17 = tpu.matmul %6, %2, %cst_19 {dimension_numbers = #tpu.dot_dimension_numbers<[1], [0], [0], [1], [0, 0, 1, 1], [], []>} : vector<16x32xf32>, vector<32x32xf32>, vector<16x32xf32> -> vector<16x32xf32>
    %c0_20 = arith.constant 0 : index
    %c0_21 = arith.constant 0 : index
    %18 = vector.load %arg9[%c0_20, %c0_21] : memref<1x32xf32, #tpu.memory_space<vmem>>, vector<1x32xf32>
    %19 = vector.broadcast %18 : vector<1x32xf32> to vector<16x32xf32>
    %20 = arith.addf %17, %19 : vector<16x32xf32>
    %c0_22 = arith.constant 0 : index
    %c0_23 = arith.constant 0 : index
    %c0_24 = arith.constant 0 : index
    %21 = vector.load %arg11[%c0_22, %c0_23, %c0_24] : memref<2x8x8xi32, #tpu.memory_space<vmem>>, vector<1x8x8xi32>
    %22 = vector.shape_cast %21 : vector<1x8x8xi32> to vector<8x8xi32>
    %c0_i32 = arith.constant 0 : i32
    %23 = vector.broadcast %c0_i32 : i32 to vector<8x8xi32>
    %24 = arith.cmpi eq, %22, %23 : vector<8x8xi32>
    %25 = vector.extract_strided_slice %12 {offsets = [0, 0], sizes = [8, 8], strides = [1, 1]} : vector<16x32xf32> to vector<8x8xf32>
    %26 = vector.extract_strided_slice %16 {offsets = [0, 0], sizes = [8, 8], strides = [1, 1]} : vector<16x32xf32> to vector<8x8xf32>
    %27 = vector.extract_strided_slice %20 {offsets = [0, 0], sizes = [8, 8], strides = [1, 1]} : vector<16x32xf32> to vector<8x8xf32>
    %cst_25 = arith.constant dense<0.000000e+00> : vector<8x8xf32>
    %28 = tpu.matmul %25, %26, %cst_25 {dimension_numbers = #tpu.dot_dimension_numbers<[1], [1], [0], [0], [0, 0, 1, 0], [], []>} : vector<8x8xf32>, vector<8x8xf32>, vector<8x8xf32> -> vector<8x8xf32>
    %cst_26 = arith.constant -1.000000e+09 : f32
    %29 = vector.broadcast %cst_26 : f32 to vector<8x8xf32>
    %30 = arith.select %24, %29, %28 : vector<8x8xi1>, vector<8x8xf32>
    %cst_27 = arith.constant dense<0xFF800000> : vector<8xf32>
    %31 = vector.multi_reduction <maximumf>, %30, %cst_27 [1] : vector<8x8xf32> to vector<8xf32>
    %32 = vector.shape_cast %31 : vector<8xf32> to vector<8x1xf32>
    %33 = vector.broadcast %32 : vector<8x1xf32> to vector<8x8xf32>
    %34 = arith.subf %30, %33 : vector<8x8xf32>
    %35 = math.exp %34 : vector<8x8xf32>
    %cst_28 = arith.constant dense<0.000000e+00> : vector<8xf32>
    %36 = vector.multi_reduction <add>, %35, %cst_28 [1] : vector<8x8xf32> to vector<8xf32>
    %37 = vector.shape_cast %36 : vector<8xf32> to vector<8x1xf32>
    %cst_29 = arith.constant dense<0.000000e+00> : vector<8x8xf32>
    %38 = tpu.matmul %35, %27, %cst_29 {dimension_numbers = #tpu.dot_dimension_numbers<[1], [0], [0], [1], [0, 0, 1, 1], [], []>} : vector<8x8xf32>, vector<8x8xf32>, vector<8x8xf32> -> vector<8x8xf32>
    %39 = tpu.reciprocal %37 {approx = true} : vector<8x1xf32> -> vector<8x1xf32>
    %40 = vector.broadcast %39 : vector<8x1xf32> to vector<8x8xf32>
    %41 = arith.mulf %38, %40 : vector<8x8xf32>
    %42 = vector.extract_strided_slice %3 {offsets = [0, 0], sizes = [8, 32], strides = [1, 1]} : vector<32x32xf32> to vector<8x32xf32>
    %cst_30 = arith.constant dense<0.000000e+00> : vector<8x32xf32>
    %43 = tpu.matmul %41, %42, %cst_30 {dimension_numbers = #tpu.dot_dimension_numbers<[1], [0], [0], [1], [0, 0, 1, 1], [], []>} : vector<8x8xf32>, vector<8x32xf32>, vector<8x32xf32> -> vector<8x32xf32>
    %44 = vector.extract_strided_slice %12 {offsets = [0, 8], sizes = [8, 8], strides = [1, 1]} : vector<16x32xf32> to vector<8x8xf32>
    %45 = vector.extract_strided_slice %16 {offsets = [0, 8], sizes = [8, 8], strides = [1, 1]} : vector<16x32xf32> to vector<8x8xf32>
    %46 = vector.extract_strided_slice %20 {offsets = [0, 8], sizes = [8, 8], strides = [1, 1]} : vector<16x32xf32> to vector<8x8xf32>
    %cst_31 = arith.constant dense<0.000000e+00> : vector<8x8xf32>
    %47 = tpu.matmul %44, %45, %cst_31 {dimension_numbers = #tpu.dot_dimension_numbers<[1], [1], [0], [0], [0, 0, 1, 0], [], []>} : vector<8x8xf32>, vector<8x8xf32>, vector<8x8xf32> -> vector<8x8xf32>
    %cst_32 = arith.constant -1.000000e+09 : f32
    %48 = vector.broadcast %cst_32 : f32 to vector<8x8xf32>
    %49 = arith.select %24, %48, %47 : vector<8x8xi1>, vector<8x8xf32>
    %cst_33 = arith.constant dense<0xFF800000> : vector<8xf32>
    %50 = vector.multi_reduction <maximumf>, %49, %cst_33 [1] : vector<8x8xf32> to vector<8xf32>
    %51 = vector.shape_cast %50 : vector<8xf32> to vector<8x1xf32>
    %52 = vector.broadcast %51 : vector<8x1xf32> to vector<8x8xf32>
    %53 = arith.subf %49, %52 : vector<8x8xf32>
    %54 = math.exp %53 : vector<8x8xf32>
    %cst_34 = arith.constant dense<0.000000e+00> : vector<8xf32>
    %55 = vector.multi_reduction <add>, %54, %cst_34 [1] : vector<8x8xf32> to vector<8xf32>
    %56 = vector.shape_cast %55 : vector<8xf32> to vector<8x1xf32>
    %cst_35 = arith.constant dense<0.000000e+00> : vector<8x8xf32>
    %57 = tpu.matmul %54, %46, %cst_35 {dimension_numbers = #tpu.dot_dimension_numbers<[1], [0], [0], [1], [0, 0, 1, 1], [], []>} : vector<8x8xf32>, vector<8x8xf32>, vector<8x8xf32> -> vector<8x8xf32>
    %58 = tpu.reciprocal %56 {approx = true} : vector<8x1xf32> -> vector<8x1xf32>
    %59 = vector.broadcast %58 : vector<8x1xf32> to vector<8x8xf32>
    %60 = arith.mulf %57, %59 : vector<8x8xf32>
    %61 = vector.extract_strided_slice %3 {offsets = [8, 0], sizes = [8, 32], strides = [1, 1]} : vector<32x32xf32> to vector<8x32xf32>
    %cst_36 = arith.constant dense<0.000000e+00> : vector<8x32xf32>
    %62 = tpu.matmul %60, %61, %cst_36 {dimension_numbers = #tpu.dot_dimension_numbers<[1], [0], [0], [1], [0, 0, 1, 1], [], []>} : vector<8x8xf32>, vector<8x32xf32>, vector<8x32xf32> -> vector<8x32xf32>
    %63 = arith.addf %43, %62 : vector<8x32xf32>
    %64 = vector.extract_strided_slice %12 {offsets = [0, 16], sizes = [8, 8], strides = [1, 1]} : vector<16x32xf32> to vector<8x8xf32>
    %65 = vector.extract_strided_slice %16 {offsets = [0, 16], sizes = [8, 8], strides = [1, 1]} : vector<16x32xf32> to vector<8x8xf32>
    %66 = vector.extract_strided_slice %20 {offsets = [0, 16], sizes = [8, 8], strides = [1, 1]} : vector<16x32xf32> to vector<8x8xf32>
    %cst_37 = arith.constant dense<0.000000e+00> : vector<8x8xf32>
    %67 = tpu.matmul %64, %65, %cst_37 {dimension_numbers = #tpu.dot_dimension_numbers<[1], [1], [0], [0], [0, 0, 1, 0], [], []>} : vector<8x8xf32>, vector<8x8xf32>, vector<8x8xf32> -> vector<8x8xf32>
    %cst_38 = arith.constant -1.000000e+09 : f32
    %68 = vector.broadcast %cst_38 : f32 to vector<8x8xf32>
    %69 = arith.select %24, %68, %67 : vector<8x8xi1>, vector<8x8xf32>
    %cst_39 = arith.constant dense<0xFF800000> : vector<8xf32>
    %70 = vector.multi_reduction <maximumf>, %69, %cst_39 [1] : vector<8x8xf32> to vector<8xf32>
    %71 = vector.shape_cast %70 : vector<8xf32> to vector<8x1xf32>
    %72 = vector.broadcast %71 : vector<8x1xf32> to vector<8x8xf32>
    %73 = arith.subf %69, %72 : vector<8x8xf32>
    %74 = math.exp %73 : vector<8x8xf32>
    %cst_40 = arith.constant dense<0.000000e+00> : vector<8xf32>
    %75 = vector.multi_reduction <add>, %74, %cst_40 [1] : vector<8x8xf32> to vector<8xf32>
    %76 = vector.shape_cast %75 : vector<8xf32> to vector<8x1xf32>
    %cst_41 = arith.constant dense<0.000000e+00> : vector<8x8xf32>
    %77 = tpu.matmul %74, %66, %cst_41 {dimension_numbers = #tpu.dot_dimension_numbers<[1], [0], [0], [1], [0, 0, 1, 1], [], []>} : vector<8x8xf32>, vector<8x8xf32>, vector<8x8xf32> -> vector<8x8xf32>
    %78 = tpu.reciprocal %76 {approx = true} : vector<8x1xf32> -> vector<8x1xf32>
    %79 = vector.broadcast %78 : vector<8x1xf32> to vector<8x8xf32>
    %80 = arith.mulf %77, %79 : vector<8x8xf32>
    %81 = vector.extract_strided_slice %3 {offsets = [16, 0], sizes = [8, 32], strides = [1, 1]} : vector<32x32xf32> to vector<8x32xf32>
    %cst_42 = arith.constant dense<0.000000e+00> : vector<8x32xf32>
    %82 = tpu.matmul %80, %81, %cst_42 {dimension_numbers = #tpu.dot_dimension_numbers<[1], [0], [0], [1], [0, 0, 1, 1], [], []>} : vector<8x8xf32>, vector<8x32xf32>, vector<8x32xf32> -> vector<8x32xf32>
    %83 = arith.addf %63, %82 : vector<8x32xf32>
    %84 = vector.extract_strided_slice %12 {offsets = [0, 24], sizes = [8, 8], strides = [1, 1]} : vector<16x32xf32> to vector<8x8xf32>
    %85 = vector.extract_strided_slice %16 {offsets = [0, 24], sizes = [8, 8], strides = [1, 1]} : vector<16x32xf32> to vector<8x8xf32>
    %86 = vector.extract_strided_slice %20 {offsets = [0, 24], sizes = [8, 8], strides = [1, 1]} : vector<16x32xf32> to vector<8x8xf32>
    %cst_43 = arith.constant dense<0.000000e+00> : vector<8x8xf32>
    %87 = tpu.matmul %84, %85, %cst_43 {dimension_numbers = #tpu.dot_dimension_numbers<[1], [1], [0], [0], [0, 0, 1, 0], [], []>} : vector<8x8xf32>, vector<8x8xf32>, vector<8x8xf32> -> vector<8x8xf32>
    %cst_44 = arith.constant -1.000000e+09 : f32
    %88 = vector.broadcast %cst_44 : f32 to vector<8x8xf32>
    %89 = arith.select %24, %88, %87 : vector<8x8xi1>, vector<8x8xf32>
    %cst_45 = arith.constant dense<0xFF800000> : vector<8xf32>
    %90 = vector.multi_reduction <maximumf>, %89, %cst_45 [1] : vector<8x8xf32> to vector<8xf32>
    %91 = vector.shape_cast %90 : vector<8xf32> to vector<8x1xf32>
    %92 = vector.broadcast %91 : vector<8x1xf32> to vector<8x8xf32>
    %93 = arith.subf %89, %92 : vector<8x8xf32>
    %94 = math.exp %93 : vector<8x8xf32>
    %cst_46 = arith.constant dense<0.000000e+00> : vector<8xf32>
    %95 = vector.multi_reduction <add>, %94, %cst_46 [1] : vector<8x8xf32> to vector<8xf32>
    %96 = vector.shape_cast %95 : vector<8xf32> to vector<8x1xf32>
    %cst_47 = arith.constant dense<0.000000e+00> : vector<8x8xf32>
    %97 = tpu.matmul %94, %86, %cst_47 {dimension_numbers = #tpu.dot_dimension_numbers<[1], [0], [0], [1], [0, 0, 1, 1], [], []>} : vector<8x8xf32>, vector<8x8xf32>, vector<8x8xf32> -> vector<8x8xf32>
    %98 = tpu.reciprocal %96 {approx = true} : vector<8x1xf32> -> vector<8x1xf32>
    %99 = vector.broadcast %98 : vector<8x1xf32> to vector<8x8xf32>
    %100 = arith.mulf %97, %99 : vector<8x8xf32>
    %101 = vector.extract_strided_slice %3 {offsets = [24, 0], sizes = [8, 32], strides = [1, 1]} : vector<32x32xf32> to vector<8x32xf32>
    %cst_48 = arith.constant dense<0.000000e+00> : vector<8x32xf32>
    %102 = tpu.matmul %100, %101, %cst_48 {dimension_numbers = #tpu.dot_dimension_numbers<[1], [0], [0], [1], [0, 0, 1, 1], [], []>} : vector<8x8xf32>, vector<8x32xf32>, vector<8x32xf32> -> vector<8x32xf32>
    %103 = arith.addf %83, %102 : vector<8x32xf32>
    %c0_49 = arith.constant 0 : index
    %c0_50 = arith.constant 0 : index
    %104 = vector.load %arg10[%c0_49, %c0_50] : memref<1x32xf32, #tpu.memory_space<vmem>>, vector<1x32xf32>
    %105 = vector.broadcast %104 : vector<1x32xf32> to vector<8x32xf32>
    %106 = arith.addf %103, %105 : vector<8x32xf32>
    %c0_51 = arith.constant 0 : index
    %c0_52 = arith.constant 0 : index
    %107 = vector.load %arg12[%c0_51, %c0_52] : memref<16x32xf32, #tpu.memory_space<vmem>>, vector<8x32xf32>
    tpu.vector_store %arg12[%c0_51, %c0_52], %106 {strides = array<i32>} : memref<16x32xf32, #tpu.memory_space<vmem>>, vector<8x32xf32>,
    %c1 = arith.constant 1 : index
    %c0_53 = arith.constant 0 : index
    %c0_54 = arith.constant 0 : index
    %108 = vector.load %arg11[%c1, %c0_53, %c0_54] : memref<2x8x8xi32, #tpu.memory_space<vmem>>, vector<1x8x8xi32>
    %109 = vector.shape_cast %108 : vector<1x8x8xi32> to vector<8x8xi32>
    %c0_i32_55 = arith.constant 0 : i32
    %110 = vector.broadcast %c0_i32_55 : i32 to vector<8x8xi32>
    %111 = arith.cmpi eq, %109, %110 : vector<8x8xi32>
    %112 = vector.extract_strided_slice %12 {offsets = [8, 0], sizes = [8, 8], strides = [1, 1]} : vector<16x32xf32> to vector<8x8xf32>
    %113 = vector.extract_strided_slice %16 {offsets = [8, 0], sizes = [8, 8], strides = [1, 1]} : vector<16x32xf32> to vector<8x8xf32>
    %114 = vector.extract_strided_slice %20 {offsets = [8, 0], sizes = [8, 8], strides = [1, 1]} : vector<16x32xf32> to vector<8x8xf32>
    %cst_56 = arith.constant dense<0.000000e+00> : vector<8x8xf32>
    %115 = tpu.matmul %112, %113, %cst_56 {dimension_numbers = #tpu.dot_dimension_numbers<[1], [1], [0], [0], [0, 0, 1, 0], [], []>} : vector<8x8xf32>, vector<8x8xf32>, vector<8x8xf32> -> vector<8x8xf32>
    %cst_57 = arith.constant -1.000000e+09 : f32
    %116 = vector.broadcast %cst_57 : f32 to vector<8x8xf32>
    %117 = arith.select %111, %116, %115 : vector<8x8xi1>, vector<8x8xf32>
    %cst_58 = arith.constant dense<0xFF800000> : vector<8xf32>
    %118 = vector.multi_reduction <maximumf>, %117, %cst_58 [1] : vector<8x8xf32> to vector<8xf32>
    %119 = vector.shape_cast %118 : vector<8xf32> to vector<8x1xf32>
    %120 = vector.broadcast %119 : vector<8x1xf32> to vector<8x8xf32>
    %121 = arith.subf %117, %120 : vector<8x8xf32>
    %122 = math.exp %121 : vector<8x8xf32>
    %cst_59 = arith.constant dense<0.000000e+00> : vector<8xf32>
    %123 = vector.multi_reduction <add>, %122, %cst_59 [1] : vector<8x8xf32> to vector<8xf32>
    %124 = vector.shape_cast %123 : vector<8xf32> to vector<8x1xf32>
    %cst_60 = arith.constant dense<0.000000e+00> : vector<8x8xf32>
    %125 = tpu.matmul %122, %114, %cst_60 {dimension_numbers = #tpu.dot_dimension_numbers<[1], [0], [0], [1], [0, 0, 1, 1], [], []>} : vector<8x8xf32>, vector<8x8xf32>, vector<8x8xf32> -> vector<8x8xf32>
    %126 = tpu.reciprocal %124 {approx = true} : vector<8x1xf32> -> vector<8x1xf32>
    %127 = vector.broadcast %126 : vector<8x1xf32> to vector<8x8xf32>
    %128 = arith.mulf %125, %127 : vector<8x8xf32>
    %129 = vector.extract_strided_slice %3 {offsets = [0, 0], sizes = [8, 32], strides = [1, 1]} : vector<32x32xf32> to vector<8x32xf32>
    %cst_61 = arith.constant dense<0.000000e+00> : vector<8x32xf32>
    %130 = tpu.matmul %128, %129, %cst_61 {dimension_numbers = #tpu.dot_dimension_numbers<[1], [0], [0], [1], [0, 0, 1, 1], [], []>} : vector<8x8xf32>, vector<8x32xf32>, vector<8x32xf32> -> vector<8x32xf32>
    %131 = vector.extract_strided_slice %12 {offsets = [8, 8], sizes = [8, 8], strides = [1, 1]} : vector<16x32xf32> to vector<8x8xf32>
    %132 = vector.extract_strided_slice %16 {offsets = [8, 8], sizes = [8, 8], strides = [1, 1]} : vector<16x32xf32> to vector<8x8xf32>
    %133 = vector.extract_strided_slice %20 {offsets = [8, 8], sizes = [8, 8], strides = [1, 1]} : vector<16x32xf32> to vector<8x8xf32>
    %cst_62 = arith.constant dense<0.000000e+00> : vector<8x8xf32>
    %134 = tpu.matmul %131, %132, %cst_62 {dimension_numbers = #tpu.dot_dimension_numbers<[1], [1], [0], [0], [0, 0, 1, 0], [], []>} : vector<8x8xf32>, vector<8x8xf32>, vector<8x8xf32> -> vector<8x8xf32>
    %cst_63 = arith.constant -1.000000e+09 : f32
    %135 = vector.broadcast %cst_63 : f32 to vector<8x8xf32>
    %136 = arith.select %111, %135, %134 : vector<8x8xi1>, vector<8x8xf32>
    %cst_64 = arith.constant dense<0xFF800000> : vector<8xf32>
    %137 = vector.multi_reduction <maximumf>, %136, %cst_64 [1] : vector<8x8xf32> to vector<8xf32>
    %138 = vector.shape_cast %137 : vector<8xf32> to vector<8x1xf32>
    %139 = vector.broadcast %138 : vector<8x1xf32> to vector<8x8xf32>
    %140 = arith.subf %136, %139 : vector<8x8xf32>
    %141 = math.exp %140 : vector<8x8xf32>
    %cst_65 = arith.constant dense<0.000000e+00> : vector<8xf32>
    %142 = vector.multi_reduction <add>, %141, %cst_65 [1] : vector<8x8xf32> to vector<8xf32>
    %143 = vector.shape_cast %142 : vector<8xf32> to vector<8x1xf32>
    %cst_66 = arith.constant dense<0.000000e+00> : vector<8x8xf32>
    %144 = tpu.matmul %141, %133, %cst_66 {dimension_numbers = #tpu.dot_dimension_numbers<[1], [0], [0], [1], [0, 0, 1, 1], [], []>} : vector<8x8xf32>, vector<8x8xf32>, vector<8x8xf32> -> vector<8x8xf32>
    %145 = tpu.reciprocal %143 {approx = true} : vector<8x1xf32> -> vector<8x1xf32>
    %146 = vector.broadcast %145 : vector<8x1xf32> to vector<8x8xf32>
    %147 = arith.mulf %144, %146 : vector<8x8xf32>
    %148 = vector.extract_strided_slice %3 {offsets = [8, 0], sizes = [8, 32], strides = [1, 1]} : vector<32x32xf32> to vector<8x32xf32>
    %cst_67 = arith.constant dense<0.000000e+00> : vector<8x32xf32>
    %149 = tpu.matmul %147, %148, %cst_67 {dimension_numbers = #tpu.dot_dimension_numbers<[1], [0], [0], [1], [0, 0, 1, 1], [], []>} : vector<8x8xf32>, vector<8x32xf32>, vector<8x32xf32> -> vector<8x32xf32>
    %150 = arith.addf %130, %149 : vector<8x32xf32>
    %151 = vector.extract_strided_slice %12 {offsets = [8, 16], sizes = [8, 8], strides = [1, 1]} : vector<16x32xf32> to vector<8x8xf32>
    %152 = vector.extract_strided_slice %16 {offsets = [8, 16], sizes = [8, 8], strides = [1, 1]} : vector<16x32xf32> to vector<8x8xf32>
    %153 = vector.extract_strided_slice %20 {offsets = [8, 16], sizes = [8, 8], strides = [1, 1]} : vector<16x32xf32> to vector<8x8xf32>
    %cst_68 = arith.constant dense<0.000000e+00> : vector<8x8xf32>
    %154 = tpu.matmul %151, %152, %cst_68 {dimension_numbers = #tpu.dot_dimension_numbers<[1], [1], [0], [0], [0, 0, 1, 0], [], []>} : vector<8x8xf32>, vector<8x8xf32>, vector<8x8xf32> -> vector<8x8xf32>
    %cst_69 = arith.constant -1.000000e+09 : f32
    %155 = vector.broadcast %cst_69 : f32 to vector<8x8xf32>
    %156 = arith.select %111, %155, %154 : vector<8x8xi1>, vector<8x8xf32>
    %cst_70 = arith.constant dense<0xFF800000> : vector<8xf32>
    %157 = vector.multi_reduction <maximumf>, %156, %cst_70 [1] : vector<8x8xf32> to vector<8xf32>
    %158 = vector.shape_cast %157 : vector<8xf32> to vector<8x1xf32>
    %159 = vector.broadcast %158 : vector<8x1xf32> to vector<8x8xf32>
    %160 = arith.subf %156, %159 : vector<8x8xf32>
    %161 = math.exp %160 : vector<8x8xf32>
    %cst_71 = arith.constant dense<0.000000e+00> : vector<8xf32>
    %162 = vector.multi_reduction <add>, %161, %cst_71 [1] : vector<8x8xf32> to vector<8xf32>
    %163 = vector.shape_cast %162 : vector<8xf32> to vector<8x1xf32>
    %cst_72 = arith.constant dense<0.000000e+00> : vector<8x8xf32>
    %164 = tpu.matmul %161, %153, %cst_72 {dimension_numbers = #tpu.dot_dimension_numbers<[1], [0], [0], [1], [0, 0, 1, 1], [], []>} : vector<8x8xf32>, vector<8x8xf32>, vector<8x8xf32> -> vector<8x8xf32>
    %165 = tpu.reciprocal %163 {approx = true} : vector<8x1xf32> -> vector<8x1xf32>
    %166 = vector.broadcast %165 : vector<8x1xf32> to vector<8x8xf32>
    %167 = arith.mulf %164, %166 : vector<8x8xf32>
    %168 = vector.extract_strided_slice %3 {offsets = [16, 0], sizes = [8, 32], strides = [1, 1]} : vector<32x32xf32> to vector<8x32xf32>
    %cst_73 = arith.constant dense<0.000000e+00> : vector<8x32xf32>
    %169 = tpu.matmul %167, %168, %cst_73 {dimension_numbers = #tpu.dot_dimension_numbers<[1], [0], [0], [1], [0, 0, 1, 1], [], []>} : vector<8x8xf32>, vector<8x32xf32>, vector<8x32xf32> -> vector<8x32xf32>
    %170 = arith.addf %150, %169 : vector<8x32xf32>
    %171 = vector.extract_strided_slice %12 {offsets = [8, 24], sizes = [8, 8], strides = [1, 1]} : vector<16x32xf32> to vector<8x8xf32>
    %172 = vector.extract_strided_slice %16 {offsets = [8, 24], sizes = [8, 8], strides = [1, 1]} : vector<16x32xf32> to vector<8x8xf32>
    %173 = vector.extract_strided_slice %20 {offsets = [8, 24], sizes = [8, 8], strides = [1, 1]} : vector<16x32xf32> to vector<8x8xf32>
    %cst_74 = arith.constant dense<0.000000e+00> : vector<8x8xf32>
    %174 = tpu.matmul %171, %172, %cst_74 {dimension_numbers = #tpu.dot_dimension_numbers<[1], [1], [0], [0], [0, 0, 1, 0], [], []>} : vector<8x8xf32>, vector<8x8xf32>, vector<8x8xf32> -> vector<8x8xf32>
    %cst_75 = arith.constant -1.000000e+09 : f32
    %175 = vector.broadcast %cst_75 : f32 to vector<8x8xf32>
    %176 = arith.select %111, %175, %174 : vector<8x8xi1>, vector<8x8xf32>
    %cst_76 = arith.constant dense<0xFF800000> : vector<8xf32>
    %177 = vector.multi_reduction <maximumf>, %176, %cst_76 [1] : vector<8x8xf32> to vector<8xf32>
    %178 = vector.shape_cast %177 : vector<8xf32> to vector<8x1xf32>
    %179 = vector.broadcast %178 : vector<8x1xf32> to vector<8x8xf32>
    %180 = arith.subf %176, %179 : vector<8x8xf32>
    %181 = math.exp %180 : vector<8x8xf32>
    %cst_77 = arith.constant dense<0.000000e+00> : vector<8xf32>
    %182 = vector.multi_reduction <add>, %181, %cst_77 [1] : vector<8x8xf32> to vector<8xf32>
    %183 = vector.shape_cast %182 : vector<8xf32> to vector<8x1xf32>
    %cst_78 = arith.constant dense<0.000000e+00> : vector<8x8xf32>
    %184 = tpu.matmul %181, %173, %cst_78 {dimension_numbers = #tpu.dot_dimension_numbers<[1], [0], [0], [1], [0, 0, 1, 1], [], []>} : vector<8x8xf32>, vector<8x8xf32>, vector<8x8xf32> -> vector<8x8xf32>
    %185 = tpu.reciprocal %183 {approx = true} : vector<8x1xf32> -> vector<8x1xf32>
    %186 = vector.broadcast %185 : vector<8x1xf32> to vector<8x8xf32>
    %187 = arith.mulf %184, %186 : vector<8x8xf32>
    %188 = vector.extract_strided_slice %3 {offsets = [24, 0], sizes = [8, 32], strides = [1, 1]} : vector<32x32xf32> to vector<8x32xf32>
    %cst_79 = arith.constant dense<0.000000e+00> : vector<8x32xf32>
    %189 = tpu.matmul %187, %188, %cst_79 {dimension_numbers = #tpu.dot_dimension_numbers<[1], [0], [0], [1], [0, 0, 1, 1], [], []>} : vector<8x8xf32>, vector<8x32xf32>, vector<8x32xf32> -> vector<8x32xf32>
    %190 = arith.addf %170, %189 : vector<8x32xf32>
    %c0_80 = arith.constant 0 : index
    %c0_81 = arith.constant 0 : index
    %191 = vector.load %arg10[%c0_80, %c0_81] : memref<1x32xf32, #tpu.memory_space<vmem>>, vector<1x32xf32>
    %192 = vector.broadcast %191 : vector<1x32xf32> to vector<8x32xf32>
    %193 = arith.addf %190, %192 : vector<8x32xf32>
    %c8 = arith.constant 8 : index
    %c0_82 = arith.constant 0 : index
    %194 = vector.load %arg12[%c8, %c0_82] : memref<16x32xf32, #tpu.memory_space<vmem>>, vector<8x32xf32>
    tpu.vector_store %arg12[%c8, %c0_82], %193 {strides = array<i32>} : memref<16x32xf32, #tpu.memory_space<vmem>>, vector<8x32xf32>,
    return
  }
}

</mosaic_0001>

<llo_original>
// kernel: tpu_custom_call.1
$region0: #{tpu_custom_call.1}
  #allocation0 [shape = 'u32[]', space=smem, size = 0x4, offset = 0x4, fixed_abs, tag = 'smem constant byte address 0x4 - core index']
  #allocation1 [shape = 'u32[72,128]{1,0:T(1,128)}', space=vmem, size = 0x9000, scoped, tag = 'internal scratch']
  %s0 = inlined_call_operand.hbm [shape: f32[16,32], index: 0, kind: input, shape index: {}]
  %s1 = inlined_call_operand.hbm [shape: f32[16,32], index: 1, kind: input, shape index: {}]
  %s2 = inlined_call_operand.hbm [shape: f32[16,32], index: 2, kind: input, shape index: {}]
  %s3 = inlined_call_operand.hbm [shape: f32[32,32], index: 3, kind: input, shape index: {}]
  %s4 = inlined_call_operand.hbm [shape: f32[32,32], index: 4, kind: input, shape index: {}]
  %s5 = inlined_call_operand.hbm [shape: f32[32,32], index: 5, kind: input, shape index: {}]
  %s6 = inlined_call_operand.hbm [shape: f32[32,32], index: 6, kind: input, shape index: {}]
  %s7 = inlined_call_operand.vmem [shape: f32[1,32], index: 7, kind: input, shape index: {}]
  %s8 = inlined_call_operand.vmem [shape: f32[1,32], index: 8, kind: input, shape index: {}]
  %s9 = inlined_call_operand.vmem [shape: f32[1,32], index: 9, kind: input, shape index: {}]
  %s10 = inlined_call_operand.vmem [shape: f32[1,32], index: 10, kind: input, shape index: {}]
  %s11 = inlined_call_operand.hbm [shape: s32[2,8,8], index: 11, kind: input, shape index: {}]
  %s12 = inlined_call_operand.hbm [shape: f32[16,32], index: 12, kind: output, shape index: {}]
  %s13 = sld [smem:[#allocation0]]
  $region90: #{tpu_custom_call.1} parent=0
    _
  %s15 = ssub.s32 1, %s13
  %s16 = scalar_select 0, %s15, %s13
  $region1: #{tpu_custom_call.1} parent=0
    #allocation2 [shape = 'u8[8192]{0}', space=vmem, size = 0x2000, scoped, tag = 'input window, operand 0, single buffered']
    #allocation3 [shape = 's32[1]{0}', space=sflag, size = 0x4, scoped, tag = 'scoped memory for tpu_custom_call.1']
    #allocation4 [shape = 's32[1]{0}', space=sflag, size = 0x4, scoped, tag = 'scoped memory for tpu_custom_call.1']
    #allocation5 [shape = 'u8[8192]{0}', space=vmem, size = 0x2000, scoped, tag = 'input window, operand 1, single buffered']
    #allocation6 [shape = 's32[1]{0}', space=sflag, size = 0x4, scoped, tag = 'scoped memory for tpu_custom_call.1']
    #allocation7 [shape = 'u8[8192]{0}', space=vmem, size = 0x2000, scoped, tag = 'input window, operand 2, single buffered']
    #allocation8 [shape = 'u8[16384]{0}', space=vmem, size = 0x4000, scoped, tag = 'input window, operand 3, single buffered']
    #allocation9 [shape = 's32[1]{0}', space=sflag, size = 0x4, scoped, tag = 'scoped memory for tpu_custom_call.1']
    #allocation10 [shape = 'u8[16384]{0}', space=vmem, size = 0x4000, scoped, tag = 'input window, operand 4, single buffered']
    #allocation11 [shape = 'u8[16384]{0}', space=vmem, size = 0x4000, scoped, tag = 'input window, operand 5, single buffered']
    #allocation12 [shape = 's32[1]{0}', space=sflag, size = 0x4, scoped, tag = 'scoped memory for tpu_custom_call.1']
    #allocation13 [shape = 'u8[16384]{0}', space=vmem, size = 0x4000, scoped, tag = 'input window, operand 6, single buffered']
    #allocation14 [shape = 'u8[8192]{0}', space=vmem, size = 0x2000, scoped, tag = 'input window, operand 11, single buffered']
    #allocation15 [shape = 's32[1]{0}', space=sflag, size = 0x4, scoped, tag = 'scoped memory for tpu_custom_call.1']
    #allocation16 [shape = 'u8[8192]{0}', space=vmem, size = 0x2000, scoped, tag = 'output window, operand 0, single buffered']
    %17 = vsyncpa [#allocation3], 0
    %18 = vsyncpa [#allocation6], 0
    %19 = vsyncpa [#allocation9], 0
    %20 = vsyncpa [#allocation12], 0
    %21 = vsyncpa [#allocation15], 0
    %22 = vsyncpa [#allocation4], 0
    // Predicated region
    $region2: #{tpu_custom_call.1} parent=1 // pred_check
      _
    $region3: #{tpu_custom_call.1} parent=1 // pred_check_branch
      %24 = sbr.rel (0) target = $region5
    $region4: #{tpu_custom_call.1} parent=1 // pred_region
      %26 = vsyncadd [#allocation3], 0
      %s27 = sshll.u32 %s0, 4
      %s28 = int_to_ptr.hbm [resolvable:$true] %s27
      %s29 = sshll.u32 [#allocation2], 4
      %s30 = int_to_ptr.vmem [resolvable:$true] %s29
      %35 = dma.hbm_to_vmem [thread:$0]  %s28, 256, %s30, [#allocation3], 128, 128, 8
    $region5: #{tpu_custom_call.1} parent=1 // pred_fallthru
      _
    // Predicated region
    $region6: #{tpu_custom_call.1} parent=1 // pred_check
      _
    $region7: #{tpu_custom_call.1} parent=1 // pred_check_branch
      %37 = sbr.rel (0) target = $region9
    $region8: #{tpu_custom_call.1} parent=1 // pred_region
      %39 = vsyncadd [#allocation6], 0
      %s40 = sshll.u32 %s1, 4
      %s41 = int_to_ptr.hbm [resolvable:$true] %s40
      %s42 = sshll.u32 [#allocation5], 4
      %s43 = int_to_ptr.vmem [resolvable:$true] %s42
      %48 = dma.hbm_to_vmem [thread:$0]  %s41, 256, %s43, [#allocation6], 128, 128, 8
    $region9: #{tpu_custom_call.1} parent=1 // pred_fallthru
      _
    // Predicated region
    $region10: #{tpu_custom_call.1} parent=1 // pred_check
      _
    $region11: #{tpu_custom_call.1} parent=1 // pred_check_branch
      %50 = sbr.rel (0) target = $region13
    $region12: #{tpu_custom_call.1} parent=1 // pred_region
      %52 = vsyncadd [#allocation6], 0
      %s53 = sshll.u32 %s2, 4
      %s54 = int_to_ptr.hbm [resolvable:$true] %s53
      %s55 = sshll.u32 [#allocation7], 4
      %s56 = int_to_ptr.vmem [resolvable:$true] %s55
      %61 = dma.hbm_to_vmem [thread:$0]  %s54, 256, %s56, [#allocation6], 128, 128, 8
    $region13: #{tpu_custom_call.1} parent=1 // pred_fallthru
      _
    // Predicated region
    $region14: #{tpu_custom_call.1} parent=1 // pred_check
      _
    $region15: #{tpu_custom_call.1} parent=1 // pred_check_branch
      %63 = sbr.rel (0) target = $region17
    $region16: #{tpu_custom_call.1} parent=1 // pred_region
      %65 = vsyncadd [#allocation9], 0
      %s66 = sshll.u32 %s3, 4
      %s67 = int_to_ptr.hbm [resolvable:$true] %s66
      %s68 = sshll.u32 [#allocation8], 4
      %s69 = int_to_ptr.vmem [resolvable:$true] %s68
      %74 = dma.hbm_to_vmem [thread:$0]  %s67, 512, %s69, [#allocation9], 128, 128, 8
    $region17: #{tpu_custom_call.1} parent=1 // pred_fallthru
      _
    // Predicated region
    $region18: #{tpu_custom_call.1} parent=1 // pred_check
      _
    $region19: #{tpu_custom_call.1} parent=1 // pred_check_branch
      %76 = sbr.rel (0) target = $region21
    $region20: #{tpu_custom_call.1} parent=1 // pred_region
      %78 = vsyncadd [#allocation9], 0
      %s79 = sshll.u32 %s4, 4
      %s80 = int_to_ptr.hbm [resolvable:$true] %s79
      %s81 = sshll.u32 [#allocation10], 4
      %s82 = int_to_ptr.vmem [resolvable:$true] %s81
      %87 = dma.hbm_to_vmem [thread:$0]  %s80, 512, %s82, [#allocation9], 128, 128, 8
    $region21: #{tpu_custom_call.1} parent=1 // pred_fallthru
      _
    // Predicated region
    $region22: #{tpu_custom_call.1} parent=1 // pred_check
      _
    $region23: #{tpu_custom_call.1} parent=1 // pred_check_branch
      %89 = sbr.rel (0) target = $region25
    $region24: #{tpu_custom_call.1} parent=1 // pred_region
      %91 = vsyncadd [#allocation12], 0
      %s92 = sshll.u32 %s5, 4
      %s93 = int_to_ptr.hbm [resolvable:$true] %s92
      %s94 = sshll.u32 [#allocation11], 4
      %s95 = int_to_ptr.vmem [resolvable:$true] %s94
      %100 = dma.hbm_to_vmem [thread:$0]  %s93, 512, %s95, [#allocation12], 128, 128, 8
    $region25: #{tpu_custom_call.1} parent=1 // pred_fallthru
      _
    // Predicated region
    $region26: #{tpu_custom_call.1} parent=1 // pred_check
      _
    $region27: #{tpu_custom_call.1} parent=1 // pred_check_branch
      %102 = sbr.rel (0) target = $region29
    $region28: #{tpu_custom_call.1} parent=1 // pred_region
      %104 = vsyncadd [#allocation12], 0
      %s105 = sshll.u32 %s6, 4
      %s106 = int_to_ptr.hbm [resolvable:$true] %s105
      %s107 = sshll.u32 [#allocation13], 4
      %s108 = int_to_ptr.vmem [resolvable:$true] %s107
      %113 = dma.hbm_to_vmem [thread:$0]  %s106, 512, %s108, [#allocation12], 128, 128, 8
    $region29: #{tpu_custom_call.1} parent=1 // pred_fallthru
      _
    // Predicated region
    $region30: #{tpu_custom_call.1} parent=1 // pred_check
      _
    $region31: #{tpu_custom_call.1} parent=1 // pred_check_branch
      %115 = sbr.rel (0) target = $region33
    $region32: #{tpu_custom_call.1} parent=1 // pred_region
      _
    $region33: #{tpu_custom_call.1} parent=1 // pred_fallthru
      _
    // Predicated region
    $region34: #{tpu_custom_call.1} parent=1 // pred_check
      _
    $region35: #{tpu_custom_call.1} parent=1 // pred_check_branch
      %117 = sbr.rel (0) target = $region37
    $region36: #{tpu_custom_call.1} parent=1 // pred_region
      _
    $region37: #{tpu_custom_call.1} parent=1 // pred_fallthru
      _
    // Predicated region
    $region38: #{tpu_custom_call.1} parent=1 // pred_check
      _
    $region39: #{tpu_custom_call.1} parent=1 // pred_check_branch
      %119 = sbr.rel (0) target = $region41
    $region40: #{tpu_custom_call.1} parent=1 // pred_region
      _
    $region41: #{tpu_custom_call.1} parent=1 // pred_fallthru
      _
    // Predicated region
    $region42: #{tpu_custom_call.1} parent=1 // pred_check
      _
    $region43: #{tpu_custom_call.1} parent=1 // pred_check_branch
      %121 = sbr.rel (0) target = $region45
    $region44: #{tpu_custom_call.1} parent=1 // pred_region
      _
    $region45: #{tpu_custom_call.1} parent=1 // pred_fallthru
      _
    // Predicated region
    $region46: #{tpu_custom_call.1} parent=1 // pred_check
      _
    $region47: #{tpu_custom_call.1} parent=1 // pred_check_branch
      %123 = sbr.rel (0) target = $region49
    $region48: #{tpu_custom_call.1} parent=1 // pred_region
      %125 = vsyncadd [#allocation15], 0
      %s126 = sshll.u32 %s11, 4
      %s127 = int_to_ptr.hbm [resolvable:$true] %s126
      %s128 = sshll.u32 [#allocation14], 4
      %s129 = int_to_ptr.vmem [resolvable:$true] %s128
      %134 = dma.hbm_to_vmem [thread:$0]  %s127, 256, %s129, [#allocation15], 128, 128, 8
    $region49: #{tpu_custom_call.1} parent=1 // pred_fallthru
      _
    // Predicated region
    $region50: #{tpu_custom_call.1} parent=1 // pred_check
      _
    $region51: #{tpu_custom_call.1} parent=1 // pred_check_branch
      %136 = sbr.rel (0) target = $region53
    $region52: #{tpu_custom_call.1} parent=1 // pred_region
      %138 = dma.done [#allocation3], 256
    $region53: #{tpu_custom_call.1} parent=1 // pred_fallthru
      _
    // Predicated region
    $region54: #{tpu_custom_call.1} parent=1 // pred_check
      _
    $region55: #{tpu_custom_call.1} parent=1 // pred_check_branch
      %140 = sbr.rel (0) target = $region57
    $region56: #{tpu_custom_call.1} parent=1 // pred_region
      %142 = dma.done [#allocation6], 256
    $region57: #{tpu_custom_call.1} parent=1 // pred_fallthru
      _
    // Predicated region
    $region58: #{tpu_custom_call.1} parent=1 // pred_check
      _
    $region59: #{tpu_custom_call.1} parent=1 // pred_check_branch
      %144 = sbr.rel (0) target = $region61
    $region60: #{tpu_custom_call.1} parent=1 // pred_region
      %146 = dma.done [#allocation6], 256
    $region61: #{tpu_custom_call.1} parent=1 // pred_fallthru
      _
    // Predicated region
    $region62: #{tpu_custom_call.1} parent=1 // pred_check
      _
    $region63: #{tpu_custom_call.1} parent=1 // pred_check_branch
      %148 = sbr.rel (0) target = $region65
    $region64: #{tpu_custom_call.1} parent=1 // pred_region
      %150 = dma.done [#allocation9], 512
    $region65: #{tpu_custom_call.1} parent=1 // pred_fallthru
      _
    // Predicated region
    $region66: #{tpu_custom_call.1} parent=1 // pred_check
      _
    $region67: #{tpu_custom_call.1} parent=1 // pred_check_branch
      %152 = sbr.rel (0) target = $region69
    $region68: #{tpu_custom_call.1} parent=1 // pred_region
      %154 = dma.done [#allocation9], 512
    $region69: #{tpu_custom_call.1} parent=1 // pred_fallthru
      _
    // Predicated region
    $region70: #{tpu_custom_call.1} parent=1 // pred_check
      _
    $region71: #{tpu_custom_call.1} parent=1 // pred_check_branch
      %156 = sbr.rel (0) target = $region73
    $region72: #{tpu_custom_call.1} parent=1 // pred_region
      %158 = dma.done [#allocation12], 512
    $region73: #{tpu_custom_call.1} parent=1 // pred_fallthru
      _
    // Predicated region
    $region74: #{tpu_custom_call.1} parent=1 // pred_check
      _
    $region75: #{tpu_custom_call.1} parent=1 // pred_check_branch
      %160 = sbr.rel (0) target = $region77
    $region76: #{tpu_custom_call.1} parent=1 // pred_region
      %162 = dma.done [#allocation12], 512
    $region77: #{tpu_custom_call.1} parent=1 // pred_fallthru
      _
    // Predicated region
    $region78: #{tpu_custom_call.1} parent=1 // pred_check
      _
    $region79: #{tpu_custom_call.1} parent=1 // pred_check_branch
      %164 = sbr.rel (0) target = $region81
    $region80: #{tpu_custom_call.1} parent=1 // pred_region
      %166 = dma.done [#allocation15], 256
    $region81: #{tpu_custom_call.1} parent=1 // pred_fallthru
      _
    %v167 = vld [vmem:[#allocation8] sm:$0xff]
    %v168 = vld [vmem:[#allocation8 + $0x8] sm:$0xff]
    %v169 = vld [vmem:[#allocation8 + $0x10] sm:$0xff]
    %v170 = vld [vmem:[#allocation8 + $0x18] sm:$0xff]
    %v171 = vld [vmem:[#allocation10] sm:$0xff]
    %v172 = vld [vmem:[#allocation10 + $0x8] sm:$0xff]
    %v173 = vld [vmem:[#allocation10 + $0x10] sm:$0xff]
    %v174 = vld [vmem:[#allocation10 + $0x18] sm:$0xff]
    %v175 = vld [vmem:[#allocation11] sm:$0xff]
    %v176 = vld [vmem:[#allocation11 + $0x8] sm:$0xff]
    %v177 = vld [vmem:[#allocation11 + $0x10] sm:$0xff]
    %v178 = vld [vmem:[#allocation11 + $0x18] sm:$0xff]
    %v179 = vld [vmem:[#allocation13] sm:$0xff]
    %v180 = vld [vmem:[#allocation13 + $0x8] sm:$0xff]
    %v181 = vld [vmem:[#allocation13 + $0x10] sm:$0xff]
    %v182 = vld [vmem:[#allocation13 + $0x18] sm:$0xff]
    %v183 = vld [vmem:[#allocation2] sm:$0xff]
    %v184 = vld [vmem:[#allocation2 + $0x8] sm:$0xff]
    %v185 = vld [vmem:[#allocation5] sm:$0xff]
    %v186 = vld [vmem:[#allocation5 + $0x8] sm:$0xff]
    %v187 = vld [vmem:[#allocation7] sm:$0xff]
    %v188 = vld [vmem:[#allocation7 + $0x8] sm:$0xff]
    %v189 = vld [vmem:[%s7] sm:$0x1]
    %v191 = vperm.slane %v189, 0
    %vm193 = vcmask 261120
    %v195 = vsel %vm193, %v183, 0
    %v198 = vsel %vm193, %v184, 0
    %200 = vmatpush.msra.mxu0 0.0
    %201 = vmatpush.msra.mxu0 0.0
    %202 = vmatpush.msra.mxu0 0.0
    %203 = vmatpush.msra.mxu0 0.0
    %204 = vmatpush.msra.mxu0 0.0
    %205 = vmatpush.msra.mxu0 0.0
    %206 = vmatpush.msra.mxu0 0.0
    %207 = vmatpush.msra.mxu0 0.0
    %208 = vmatpush.msra.mxu0 0.0
    %209 = vmatpush.msra.mxu0 0.0
    %210 = vmatpush.msra.mxu0 0.0
    %211 = vmatpush.msra.mxu0 0.0
    %212 = vmatpush.msra.mxu0 %v170
    %213 = vmatpush.msra.mxu0 %v169
    %214 = vmatpush.msra.mxu0 %v168
    %215 = vmatpush.msra.mxu0 %v167
    %216 = vmatmul.f32.gmra.mxu0 %v195
    %v217 = vpop.f32.mrf.mxu0
    %v218 = vadd.f32 %v191, %v217
    %219 = vmatmul.f32.gmra.mxu0 %v198
    %v220 = vpop.f32.mrf.mxu0
    %v221 = vadd.f32 %v191, %v220
    %222 = vdwg.mxu0
    %v223 = vmul.f32 %v218, 0.35355338
    %v224 = vmul.f32 %v221, 0.35355338
    %v225 = vld [vmem:[%s8] sm:$0x1]
    %v227 = vperm.slane %v225, 0
    %v230 = vsel %vm193, %v185, 0
    %v233 = vsel %vm193, %v186, 0
    %235 = vmatpush.msra.mxu0 0.0
    %236 = vmatpush.msra.mxu0 0.0
    %237 = vmatpush.msra.mxu0 0.0
    %238 = vmatpush.msra.mxu0 0.0
    %239 = vmatpush.msra.mxu0 0.0
    %240 = vmatpush.msra.mxu0 0.0
    %241 = vmatpush.msra.mxu0 0.0
    %242 = vmatpush.msra.mxu0 0.0
    %243 = vmatpush.msra.mxu0 0.0
    %244 = vmatpush.msra.mxu0 0.0
    %245 = vmatpush.msra.mxu0 0.0
    %246 = vmatpush.msra.mxu0 0.0
    %247 = vmatpush.msra.mxu0 %v174
    %248 = vmatpush.msra.mxu0 %v173
    %249 = vmatpush.msra.mxu0 %v172
    %250 = vmatpush.msra.mxu0 %v171
    %251 = vmatmul.f32.gmra.mxu0 %v230
    %v252 = vpop.f32.mrf.mxu0
    %v253 = vadd.f32 %v227, %v252
    %254 = vmatmul.f32.gmra.mxu0 %v233
    %v255 = vpop.f32.mrf.mxu0
    %v256 = vadd.f32 %v227, %v255
    %257 = vdwg.mxu0
    %v258 = vld [vmem:[%s9] sm:$0x1]
    %v260 = vperm.slane %v258, 0
    %v263 = vsel %vm193, %v187, 0
    %v266 = vsel %vm193, %v188, 0
    %268 = vmatpush.msra.mxu0 0.0
    %269 = vmatpush.msra.mxu0 0.0
    %270 = vmatpush.msra.mxu0 0.0
    %271 = vmatpush.msra.mxu0 0.0
    %272 = vmatpush.msra.mxu0 0.0
    %273 = vmatpush.msra.mxu0 0.0
    %274 = vmatpush.msra.mxu0 0.0
    %275 = vmatpush.msra.mxu0 0.0
    %276 = vmatpush.msra.mxu0 0.0
    %277 = vmatpush.msra.mxu0 0.0
    %278 = vmatpush.msra.mxu0 0.0
    %279 = vmatpush.msra.mxu0 0.0
    %280 = vmatpush.msra.mxu0 %v178
    %281 = vmatpush.msra.mxu0 %v177
    %282 = vmatpush.msra.mxu0 %v176
    %283 = vmatpush.msra.mxu0 %v175
    %284 = vmatmul.f32.gmra.mxu0 %v263
    %v285 = vpop.f32.mrf.mxu0
    %v286 = vadd.f32 %v260, %v285
    %287 = vmatmul.f32.gmra.mxu0 %v266
    %v288 = vpop.f32.mrf.mxu0
    %v289 = vadd.f32 %v260, %v288
    %290 = vdwg.mxu0
    %v291 = vld [vmem:[#allocation14] sm:$0xff]
    %vm292 = vcmp.eq.s32.totalorder %v291, 0
    %vm293 = vcmask 64512
    %v295 = vsel %vm293, %v223, 0
    %v298 = vsel %vm293, %v253, 0
    %300 = vmatpush.xpose.msra.mxu0 0.0
    %301 = vmatpush.xpose.msra.mxu0 0.0
    %302 = vmatpush.xpose.msra.mxu0 0.0
    %303 = vmatpush.xpose.msra.mxu0 0.0
    %304 = vmatpush.xpose.msra.mxu0 0.0
    %305 = vmatpush.xpose.msra.mxu0 0.0
    %306 = vmatpush.xpose.msra.mxu0 0.0
    %307 = vmatpush.xpose.msra.mxu0 0.0
    %308 = vmatpush.xpose.msra.mxu0 0.0
    %309 = vmatpush.xpose.msra.mxu0 0.0
    %310 = vmatpush.xpose.msra.mxu0 0.0
    %311 = vmatpush.xpose.msra.mxu0 0.0
    %312 = vmatpush.xpose.msra.mxu0 0.0
    %313 = vmatpush.xpose.msra.mxu0 0.0
    %314 = vmatpush.xpose.msra.mxu0 0.0
    %315 = vmatpush.xpose.msra.mxu0 %v298
    %316 = vmatmul.f32.gmra.mxu0 %v295
    %v317 = vpop.f32.mrf.mxu0
    %v318 = vadd.f32 0.0, %v317
    %319 = vdwg.mxu0
    %v320 = vsel %vm292, -1e+09, %v318
    %v321 = vsel %vm293, %v320, -inf
    %322 = vmax.xlane.f32.xlu0 %v321
    %v323 = vpop.xlane.xlu0 %322
    %v324 = vsub.f32 %v320, %v323
    %v325 = vmul.f32 %v324, 1.442695
    %v326 = vpow.pop %v325
    %v327 = vsel %vm293, %v326, 0.0
    %328 = vadd.xlane.f32.xlu0 %v327
    %v329 = vpop.xlane.xlu0 %328
    %v331 = vsel %vm293, %v326, 0
    %333 = vmatpush.msra.mxu0 0.0
    %334 = vmatpush.msra.mxu0 0.0
    %335 = vmatpush.msra.mxu0 0.0
    %336 = vmatpush.msra.mxu0 0.0
    %337 = vmatpush.msra.mxu0 0.0
    %338 = vmatpush.msra.mxu0 0.0
    %339 = vmatpush.msra.mxu0 0.0
    %340 = vmatpush.msra.mxu0 0.0
    %341 = vmatpush.msra.mxu0 0.0
    %342 = vmatpush.msra.mxu0 0.0
    %343 = vmatpush.msra.mxu0 0.0
    %344 = vmatpush.msra.mxu0 0.0
    %345 = vmatpush.msra.mxu0 0.0
    %346 = vmatpush.msra.mxu0 0.0
    %347 = vmatpush.msra.mxu0 0.0
    %348 = vmatpush.msra.mxu0 %v286
    %349 = vmatmul.f32.gmra.mxu0 %v331
    %v350 = vpop.f32.mrf.mxu0
    %v351 = vadd.f32 0.0, %v350
    %352 = vdwg.mxu0
    %v353 = vrcp.pop %v329
    %v354 = vmul.f32 %v351, %v353
    %355 = vrot.lane.b32.xlu0 %v223, 120
    %v356 = vpop.permute.xlu0 %355
    %357 = vrot.lane.b32.xlu0 %v253, 120
    %v358 = vpop.permute.xlu0 %357
    %v359 = vsel %vm293, %v356, 0
    %v361 = vsel %vm293, %v358, 0
    %363 = vmatpush.xpose.msra.mxu0 0.0
    %364 = vmatpush.xpose.msra.mxu0 0.0
    %365 = vmatpush.xpose.msra.mxu0 0.0
    %366 = vmatpush.xpose.msra.mxu0 0.0
    %367 = vmatpush.xpose.msra.mxu0 0.0
    %368 = vmatpush.xpose.msra.mxu0 0.0
    %369 = vmatpush.xpose.msra.mxu0 0.0
    %370 = vmatpush.xpose.msra.mxu0 0.0
    %371 = vmatpush.xpose.msra.mxu0 0.0
    %372 = vmatpush.xpose.msra.mxu0 0.0
    %373 = vmatpush.xpose.msra.mxu0 0.0
    %374 = vmatpush.xpose.msra.mxu0 0.0
    %375 = vmatpush.xpose.msra.mxu0 0.0
    %376 = vmatpush.xpose.msra.mxu0 0.0
    %377 = vmatpush.xpose.msra.mxu0 0.0
    %378 = vmatpush.xpose.msra.mxu0 %v361
    %379 = vmatmul.f32.gmra.mxu0 %v359
    %v380 = vpop.f32.mrf.mxu0
    %v381 = vadd.f32 0.0, %v380
    %382 = vdwg.mxu0
    %v383 = vsel %vm292, -1e+09, %v381
    %v384 = vsel %vm293, %v383, -inf
    %385 = vmax.xlane.f32.xlu0 %v384
    %v386 = vpop.xlane.xlu0 %385
    %v387 = vsub.f32 %v383, %v386
    %v388 = vmul.f32 %v387, 1.442695
    %v389 = vpow.pop %v388
    %v390 = vsel %vm293, %v389, 0.0
    %391 = vadd.xlane.f32.xlu0 %v390
    %v392 = vpop.xlane.xlu0 %391
    %394 = vrot.lane.b32.xlu0 %v286, 120
    %v395 = vpop.permute.xlu0 %394
    %v398 = vsel %vm293, %v389, 0
    %400 = vmatpush.msra.mxu0 0.0
    %401 = vmatpush.msra.mxu0 0.0
    %402 = vmatpush.msra.mxu0 0.0
    %403 = vmatpush.msra.mxu0 0.0
    %404 = vmatpush.msra.mxu0 0.0
    %405 = vmatpush.msra.mxu0 0.0
    %406 = vmatpush.msra.mxu0 0.0
    %407 = vmatpush.msra.mxu0 0.0
    %408 = vmatpush.msra.mxu0 0.0
    %409 = vmatpush.msra.mxu0 0.0
    %410 = vmatpush.msra.mxu0 0.0
    %411 = vmatpush.msra.mxu0 0.0
    %412 = vmatpush.msra.mxu0 0.0
    %413 = vmatpush.msra.mxu0 0.0
    %414 = vmatpush.msra.mxu0 0.0
    %415 = vmatpush.msra.mxu0 %v395
    %416 = vmatmul.f32.gmra.mxu0 %v398
    %v417 = vpop.f32.mrf.mxu0
    %v418 = vadd.f32 0.0, %v417
    %419 = vdwg.mxu0
    %v420 = vrcp.pop %v392
    %v421 = vmul.f32 %v418, %v420
    %v423 = vsel %vm293, %v421, 0
    %425 = vmatpush.msra.mxu0 0.0
    %426 = vmatpush.msra.mxu0 0.0
    %427 = vmatpush.msra.mxu0 0.0
    %428 = vmatpush.msra.mxu0 0.0
    %429 = vmatpush.msra.mxu0 0.0
    %430 = vmatpush.msra.mxu0 0.0
    %431 = vmatpush.msra.mxu0 0.0
    %432 = vmatpush.msra.mxu0 0.0
    %433 = vmatpush.msra.mxu0 0.0
    %434 = vmatpush.msra.mxu0 0.0
    %435 = vmatpush.msra.mxu0 0.0
    %436 = vmatpush.msra.mxu0 0.0
    %437 = vmatpush.msra.mxu0 0.0
    %438 = vmatpush.msra.mxu0 0.0
    %439 = vmatpush.msra.mxu0 0.0
    %440 = vmatpush.msra.mxu0 %v180
    %441 = vmatmul.f32.gmra.mxu0 %v423
    %v442 = vpop.f32.mrf.mxu0
    %v443 = vadd.f32 0.0, %v442
    %444 = vdwg.mxu0
    %v446 = vsel %vm293, %v354, 0
    %448 = vmatpush.msra.mxu0 0.0
    %449 = vmatpush.msra.mxu0 0.0
    %450 = vmatpush.msra.mxu0 0.0
    %451 = vmatpush.msra.mxu0 0.0
    %452 = vmatpush.msra.mxu0 0.0
    %453 = vmatpush.msra.mxu0 0.0
    %454 = vmatpush.msra.mxu0 0.0
    %455 = vmatpush.msra.mxu0 0.0
    %456 = vmatpush.msra.mxu0 0.0
    %457 = vmatpush.msra.mxu0 0.0
    %458 = vmatpush.msra.mxu0 0.0
    %459 = vmatpush.msra.mxu0 0.0
    %460 = vmatpush.msra.mxu0 0.0
    %461 = vmatpush.msra.mxu0 0.0
    %462 = vmatpush.msra.mxu0 0.0
    %463 = vmatpush.msra.mxu0 %v179
    %464 = vmatmul.f32.gmra.mxu0 %v446
    %v465 = vpop.f32.mrf.mxu0
    %v466 = vadd.f32 %v443, %v465
    %467 = vdwg.mxu0
    %468 = vrot.lane.b32.xlu0 %v223, 112
    %v469 = vpop.permute.xlu0 %468
    %470 = vrot.lane.b32.xlu0 %v253, 112
    %v471 = vpop.permute.xlu0 %470
    %v472 = vsel %vm293, %v469, 0
    %v474 = vsel %vm293, %v471, 0
    %476 = vmatpush.xpose.msra.mxu0 0.0
    %477 = vmatpush.xpose.msra.mxu0 0.0
    %478 = vmatpush.xpose.msra.mxu0 0.0
    %479 = vmatpush.xpose.msra.mxu0 0.0
    %480 = vmatpush.xpose.msra.mxu0 0.0
    %481 = vmatpush.xpose.msra.mxu0 0.0
    %482 = vmatpush.xpose.msra.mxu0 0.0
    %483 = vmatpush.xpose.msra.mxu0 0.0
    %484 = vmatpush.xpose.msra.mxu0 0.0
    %485 = vmatpush.xpose.msra.mxu0 0.0
    %486 = vmatpush.xpose.msra.mxu0 0.0
    %487 = vmatpush.xpose.msra.mxu0 0.0
    %488 = vmatpush.xpose.msra.mxu0 0.0
    %489 = vmatpush.xpose.msra.mxu0 0.0
    %490 = vmatpush.xpose.msra.mxu0 0.0
    %491 = vmatpush.xpose.msra.mxu0 %v474
    %492 = vmatmul.f32.gmra.mxu0 %v472
    %v493 = vpop.f32.mrf.mxu0
    %v494 = vadd.f32 0.0, %v493
    %495 = vdwg.mxu0
    %v496 = vsel %vm292, -1e+09, %v494
    %v497 = vsel %vm293, %v496, -inf
    %498 = vmax.xlane.f32.xlu0 %v497
    %v499 = vpop.xlane.xlu0 %498
    %v500 = vsub.f32 %v496, %v499
    %v501 = vmul.f32 %v500, 1.442695
    %v502 = vpow.pop %v501
    %v503 = vsel %vm293, %v502, 0.0
    %504 = vadd.xlane.f32.xlu0 %v503
    %v505 = vpop.xlane.xlu0 %504
    %506 = vrot.lane.b32.xlu0 %v286, 112
    %v507 = vpop.permute.xlu0 %506
    %v510 = vsel %vm293, %v502, 0
    %512 = vmatpush.msra.mxu0 0.0
    %513 = vmatpush.msra.mxu0 0.0
    %514 = vmatpush.msra.mxu0 0.0
    %515 = vmatpush.msra.mxu0 0.0
    %516 = vmatpush.msra.mxu0 0.0
    %517 = vmatpush.msra.mxu0 0.0
    %518 = vmatpush.msra.mxu0 0.0
    %519 = vmatpush.msra.mxu0 0.0
    %520 = vmatpush.msra.mxu0 0.0
    %521 = vmatpush.msra.mxu0 0.0
    %522 = vmatpush.msra.mxu0 0.0
    %523 = vmatpush.msra.mxu0 0.0
    %524 = vmatpush.msra.mxu0 0.0
    %525 = vmatpush.msra.mxu0 0.0
    %526 = vmatpush.msra.mxu0 0.0
    %527 = vmatpush.msra.mxu0 %v507
    %528 = vmatmul.f32.gmra.mxu0 %v510
    %v529 = vpop.f32.mrf.mxu0
    %v530 = vadd.f32 0.0, %v529
    %531 = vdwg.mxu0
    %v532 = vrcp.pop %v505
    %v533 = vmul.f32 %v530, %v532
    %v535 = vsel %vm293, %v533, 0
    %537 = vmatpush.msra.mxu0 0.0
    %538 = vmatpush.msra.mxu0 0.0
    %539 = vmatpush.msra.mxu0 0.0
    %540 = vmatpush.msra.mxu0 0.0
    %541 = vmatpush.msra.mxu0 0.0
    %542 = vmatpush.msra.mxu0 0.0
    %543 = vmatpush.msra.mxu0 0.0
    %544 = vmatpush.msra.mxu0 0.0
    %545 = vmatpush.msra.mxu0 0.0
    %546 = vmatpush.msra.mxu0 0.0
    %547 = vmatpush.msra.mxu0 0.0
    %548 = vmatpush.msra.mxu0 0.0
    %549 = vmatpush.msra.mxu0 0.0
    %550 = vmatpush.msra.mxu0 0.0
    %551 = vmatpush.msra.mxu0 0.0
    %552 = vmatpush.msra.mxu0 %v181
    %553 = vmatmul.f32.gmra.mxu0 %v535
    %v554 = vpop.f32.mrf.mxu0
    %v555 = vadd.f32 0.0, %v554
    %556 = vdwg.mxu0
    %v557 = vadd.f32 %v466, %v555
    %558 = vrot.lane.b32.xlu0 %v223, 104
    %v559 = vpop.permute.xlu0 %558
    %560 = vrot.lane.b32.xlu0 %v253, 104
    %v561 = vpop.permute.xlu0 %560
    %v562 = vsel %vm293, %v559, 0
    %v564 = vsel %vm293, %v561, 0
    %566 = vmatpush.xpose.msra.mxu0 0.0
    %567 = vmatpush.xpose.msra.mxu0 0.0
    %568 = vmatpush.xpose.msra.mxu0 0.0
    %569 = vmatpush.xpose.msra.mxu0 0.0
    %570 = vmatpush.xpose.msra.mxu0 0.0
    %571 = vmatpush.xpose.msra.mxu0 0.0
    %572 = vmatpush.xpose.msra.mxu0 0.0
    %573 = vmatpush.xpose.msra.mxu0 0.0
    %574 = vmatpush.xpose.msra.mxu0 0.0
    %575 = vmatpush.xpose.msra.mxu0 0.0
    %576 = vmatpush.xpose.msra.mxu0 0.0
    %577 = vmatpush.xpose.msra.mxu0 0.0
    %578 = vmatpush.xpose.msra.mxu0 0.0
    %579 = vmatpush.xpose.msra.mxu0 0.0
    %580 = vmatpush.xpose.msra.mxu0 0.0
    %581 = vmatpush.xpose.msra.mxu0 %v564
    %582 = vmatmul.f32.gmra.mxu0 %v562
    %v583 = vpop.f32.mrf.mxu0
    %v584 = vadd.f32 0.0, %v583
    %585 = vdwg.mxu0
    %v586 = vsel %vm292, -1e+09, %v584
    %v587 = vsel %vm293, %v586, -inf
    %588 = vmax.xlane.f32.xlu0 %v587
    %v589 = vpop.xlane.xlu0 %588
    %v590 = vsub.f32 %v586, %v589
    %v591 = vmul.f32 %v590, 1.442695
    %v592 = vpow.pop %v591
    %v593 = vsel %vm293, %v592, 0.0
    %594 = vadd.xlane.f32.xlu0 %v593
    %v595 = vpop.xlane.xlu0 %594
    %596 = vrot.lane.b32.xlu0 %v286, 104
    %v597 = vpop.permute.xlu0 %596
    %v600 = vsel %vm293, %v592, 0
    %602 = vmatpush.msra.mxu0 0.0
    %603 = vmatpush.msra.mxu0 0.0
    %604 = vmatpush.msra.mxu0 0.0
    %605 = vmatpush.msra.mxu0 0.0
    %606 = vmatpush.msra.mxu0 0.0
    %607 = vmatpush.msra.mxu0 0.0
    %608 = vmatpush.msra.mxu0 0.0
    %609 = vmatpush.msra.mxu0 0.0
    %610 = vmatpush.msra.mxu0 0.0
    %611 = vmatpush.msra.mxu0 0.0
    %612 = vmatpush.msra.mxu0 0.0
    %613 = vmatpush.msra.mxu0 0.0
    %614 = vmatpush.msra.mxu0 0.0
    %615 = vmatpush.msra.mxu0 0.0
    %616 = vmatpush.msra.mxu0 0.0
    %617 = vmatpush.msra.mxu0 %v597
    %618 = vmatmul.f32.gmra.mxu0 %v600
    %v619 = vpop.f32.mrf.mxu0
    %v620 = vadd.f32 0.0, %v619
    %621 = vdwg.mxu0
    %v622 = vrcp.pop %v595
    %v623 = vmul.f32 %v620, %v622
    %v625 = vsel %vm293, %v623, 0
    %627 = vmatpush.msra.mxu0 0.0
    %628 = vmatpush.msra.mxu0 0.0
    %629 = vmatpush.msra.mxu0 0.0
    %630 = vmatpush.msra.mxu0 0.0
    %631 = vmatpush.msra.mxu0 0.0
    %632 = vmatpush.msra.mxu0 0.0
    %633 = vmatpush.msra.mxu0 0.0
    %634 = vmatpush.msra.mxu0 0.0
    %635 = vmatpush.msra.mxu0 0.0
    %636 = vmatpush.msra.mxu0 0.0
    %637 = vmatpush.msra.mxu0 0.0
    %638 = vmatpush.msra.mxu0 0.0
    %639 = vmatpush.msra.mxu0 0.0
    %640 = vmatpush.msra.mxu0 0.0
    %641 = vmatpush.msra.mxu0 0.0
    %642 = vmatpush.msra.mxu0 %v182
    %643 = vmatmul.f32.gmra.mxu0 %v625
    %v644 = vpop.f32.mrf.mxu0
    %v645 = vadd.f32 0.0, %v644
    %646 = vdwg.mxu0
    %v647 = vadd.f32 %v557, %v645
    %v648 = vld [vmem:[%s10] sm:$0x1]
    %v650 = vperm.slane %v648, 0
    %v652 = vadd.f32 %v647, %v650
    %653 = vst.msk [vmem:[#allocation16] sm:$0xff] %vm193, %v652
    %s654 = scalar_lea.vmem [#allocation14], 8
    %v655 = vld [vmem:[%s654] sm:$0xff]
    %vm656 = vcmp.eq.s32.totalorder %v655, 0
    %v658 = vsel %vm293, %v224, 0
    %v661 = vsel %vm293, %v256, 0
    %663 = vmatpush.xpose.msra.mxu0 0.0
    %664 = vmatpush.xpose.msra.mxu0 0.0
    %665 = vmatpush.xpose.msra.mxu0 0.0
    %666 = vmatpush.xpose.msra.mxu0 0.0
    %667 = vmatpush.xpose.msra.mxu0 0.0
    %668 = vmatpush.xpose.msra.mxu0 0.0
    %669 = vmatpush.xpose.msra.mxu0 0.0
    %670 = vmatpush.xpose.msra.mxu0 0.0
    %671 = vmatpush.xpose.msra.mxu0 0.0
    %672 = vmatpush.xpose.msra.mxu0 0.0
    %673 = vmatpush.xpose.msra.mxu0 0.0
    %674 = vmatpush.xpose.msra.mxu0 0.0
    %675 = vmatpush.xpose.msra.mxu0 0.0
    %676 = vmatpush.xpose.msra.mxu0 0.0
    %677 = vmatpush.xpose.msra.mxu0 0.0
    %678 = vmatpush.xpose.msra.mxu0 %v661
    %679 = vmatmul.f32.gmra.mxu0 %v658
    %v680 = vpop.f32.mrf.mxu0
    %v681 = vadd.f32 0.0, %v680
    %682 = vdwg.mxu0
    %v683 = vsel %vm656, -1e+09, %v681
    %v684 = vsel %vm293, %v683, -inf
    %685 = vmax.xlane.f32.xlu0 %v684
    %v686 = vpop.xlane.xlu0 %685
    %v687 = vsub.f32 %v683, %v686
    %v688 = vmul.f32 %v687, 1.442695
    %v689 = vpow.pop %v688
    %v690 = vsel %vm293, %v689, 0.0
    %691 = vadd.xlane.f32.xlu0 %v690
    %v692 = vpop.xlane.xlu0 %691
    %v694 = vsel %vm293, %v689, 0
    %696 = vmatpush.msra.mxu0 0.0
    %697 = vmatpush.msra.mxu0 0.0
    %698 = vmatpush.msra.mxu0 0.0
    %699 = vmatpush.msra.mxu0 0.0
    %700 = vmatpush.msra.mxu0 0.0
    %701 = vmatpush.msra.mxu0 0.0
    %702 = vmatpush.msra.mxu0 0.0
    %703 = vmatpush.msra.mxu0 0.0
    %704 = vmatpush.msra.mxu0 0.0
    %705 = vmatpush.msra.mxu0 0.0
    %706 = vmatpush.msra.mxu0 0.0
    %707 = vmatpush.msra.mxu0 0.0
    %708 = vmatpush.msra.mxu0 0.0
    %709 = vmatpush.msra.mxu0 0.0
    %710 = vmatpush.msra.mxu0 0.0
    %711 = vmatpush.msra.mxu0 %v289
    %712 = vmatmul.f32.gmra.mxu0 %v694
    %v713 = vpop.f32.mrf.mxu0
    %v714 = vadd.f32 0.0, %v713
    %715 = vdwg.mxu0
    %v716 = vrcp.pop %v692
    %v717 = vmul.f32 %v714, %v716
    %718 = vrot.lane.b32.xlu0 %v224, 120
    %v719 = vpop.permute.xlu0 %718
    %720 = vrot.lane.b32.xlu0 %v256, 120
    %v721 = vpop.permute.xlu0 %720
    %v722 = vsel %vm293, %v719, 0
    %v724 = vsel %vm293, %v721, 0
    %726 = vmatpush.xpose.msra.mxu0 0.0
    %727 = vmatpush.xpose.msra.mxu0 0.0
    %728 = vmatpush.xpose.msra.mxu0 0.0
    %729 = vmatpush.xpose.msra.mxu0 0.0
    %730 = vmatpush.xpose.msra.mxu0 0.0
    %731 = vmatpush.xpose.msra.mxu0 0.0
    %732 = vmatpush.xpose.msra.mxu0 0.0
    %733 = vmatpush.xpose.msra.mxu0 0.0
    %734 = vmatpush.xpose.msra.mxu0 0.0
    %735 = vmatpush.xpose.msra.mxu0 0.0
    %736 = vmatpush.xpose.msra.mxu0 0.0
    %737 = vmatpush.xpose.msra.mxu0 0.0
    %738 = vmatpush.xpose.msra.mxu0 0.0
    %739 = vmatpush.xpose.msra.mxu0 0.0
    %740 = vmatpush.xpose.msra.mxu0 0.0
    %741 = vmatpush.xpose.msra.mxu0 %v724
    %742 = vmatmul.f32.gmra.mxu0 %v722
    %v743 = vpop.f32.mrf.mxu0
    %v744 = vadd.f32 0.0, %v743
    %745 = vdwg.mxu0
    %v746 = vsel %vm656, -1e+09, %v744
    %v747 = vsel %vm293, %v746, -inf
    %748 = vmax.xlane.f32.xlu0 %v747
    %v749 = vpop.xlane.xlu0 %748
    %v750 = vsub.f32 %v746, %v749
    %v751 = vmul.f32 %v750, 1.442695
    %v752 = vpow.pop %v751
    %v753 = vsel %vm293, %v752, 0.0
    %754 = vadd.xlane.f32.xlu0 %v753
    %v755 = vpop.xlane.xlu0 %754
    %757 = vrot.lane.b32.xlu0 %v289, 120
    %v758 = vpop.permute.xlu0 %757
    %v761 = vsel %vm293, %v752, 0
    %763 = vmatpush.msra.mxu0 0.0
    %764 = vmatpush.msra.mxu0 0.0
    %765 = vmatpush.msra.mxu0 0.0
    %766 = vmatpush.msra.mxu0 0.0
    %767 = vmatpush.msra.mxu0 0.0
    %768 = vmatpush.msra.mxu0 0.0
    %769 = vmatpush.msra.mxu0 0.0
    %770 = vmatpush.msra.mxu0 0.0
    %771 = vmatpush.msra.mxu0 0.0
    %772 = vmatpush.msra.mxu0 0.0
    %773 = vmatpush.msra.mxu0 0.0
    %774 = vmatpush.msra.mxu0 0.0
    %775 = vmatpush.msra.mxu0 0.0
    %776 = vmatpush.msra.mxu0 0.0
    %777 = vmatpush.msra.mxu0 0.0
    %778 = vmatpush.msra.mxu0 %v758
    %779 = vmatmul.f32.gmra.mxu0 %v761
    %v780 = vpop.f32.mrf.mxu0
    %v781 = vadd.f32 0.0, %v780
    %782 = vdwg.mxu0
    %v783 = vrcp.pop %v755
    %v784 = vmul.f32 %v781, %v783
    %v786 = vsel %vm293, %v784, 0
    %788 = vmatpush.msra.mxu0 0.0
    %789 = vmatpush.msra.mxu0 0.0
    %790 = vmatpush.msra.mxu0 0.0
    %791 = vmatpush.msra.mxu0 0.0
    %792 = vmatpush.msra.mxu0 0.0
    %793 = vmatpush.msra.mxu0 0.0
    %794 = vmatpush.msra.mxu0 0.0
    %795 = vmatpush.msra.mxu0 0.0
    %796 = vmatpush.msra.mxu0 0.0
    %797 = vmatpush.msra.mxu0 0.0
    %798 = vmatpush.msra.mxu0 0.0
    %799 = vmatpush.msra.mxu0 0.0
    %800 = vmatpush.msra.mxu0 0.0
    %801 = vmatpush.msra.mxu0 0.0
    %802 = vmatpush.msra.mxu0 0.0
    %803 = vmatpush.msra.mxu0 %v180
    %804 = vmatmul.f32.gmra.mxu0 %v786
    %v805 = vpop.f32.mrf.mxu0
    %v806 = vadd.f32 0.0, %v805
    %807 = vdwg.mxu0
    %v809 = vsel %vm293, %v717, 0
    %811 = vmatpush.msra.mxu0 0.0
    %812 = vmatpush.msra.mxu0 0.0
    %813 = vmatpush.msra.mxu0 0.0
    %814 = vmatpush.msra.mxu0 0.0
    %815 = vmatpush.msra.mxu0 0.0
    %816 = vmatpush.msra.mxu0 0.0
    %817 = vmatpush.msra.mxu0 0.0
    %818 = vmatpush.msra.mxu0 0.0
    %819 = vmatpush.msra.mxu0 0.0
    %820 = vmatpush.msra.mxu0 0.0
    %821 = vmatpush.msra.mxu0 0.0
    %822 = vmatpush.msra.mxu0 0.0
    %823 = vmatpush.msra.mxu0 0.0
    %824 = vmatpush.msra.mxu0 0.0
    %825 = vmatpush.msra.mxu0 0.0
    %826 = vmatpush.msra.mxu0 %v179
    %827 = vmatmul.f32.gmra.mxu0 %v809
    %v828 = vpop.f32.mrf.mxu0
    %v829 = vadd.f32 %v806, %v828
    %830 = vdwg.mxu0
    %831 = vrot.lane.b32.xlu0 %v224, 112
    %v832 = vpop.permute.xlu0 %831
    %833 = vrot.lane.b32.xlu0 %v256, 112
    %v834 = vpop.permute.xlu0 %833
    %v835 = vsel %vm293, %v832, 0
    %v837 = vsel %vm293, %v834, 0
    %839 = vmatpush.xpose.msra.mxu0 0.0
    %840 = vmatpush.xpose.msra.mxu0 0.0
    %841 = vmatpush.xpose.msra.mxu0 0.0
    %842 = vmatpush.xpose.msra.mxu0 0.0
    %843 = vmatpush.xpose.msra.mxu0 0.0
    %844 = vmatpush.xpose.msra.mxu0 0.0
    %845 = vmatpush.xpose.msra.mxu0 0.0
    %846 = vmatpush.xpose.msra.mxu0 0.0
    %847 = vmatpush.xpose.msra.mxu0 0.0
    %848 = vmatpush.xpose.msra.mxu0 0.0
    %849 = vmatpush.xpose.msra.mxu0 0.0
    %850 = vmatpush.xpose.msra.mxu0 0.0
    %851 = vmatpush.xpose.msra.mxu0 0.0
    %852 = vmatpush.xpose.msra.mxu0 0.0
    %853 = vmatpush.xpose.msra.mxu0 0.0
    %854 = vmatpush.xpose.msra.mxu0 %v837
    %855 = vmatmul.f32.gmra.mxu0 %v835
    %v856 = vpop.f32.mrf.mxu0
    %v857 = vadd.f32 0.0, %v856
    %858 = vdwg.mxu0
    %v859 = vsel %vm656, -1e+09, %v857
    %v860 = vsel %vm293, %v859, -inf
    %861 = vmax.xlane.f32.xlu0 %v860
    %v862 = vpop.xlane.xlu0 %861
    %v863 = vsub.f32 %v859, %v862
    %v864 = vmul.f32 %v863, 1.442695
    %v865 = vpow.pop %v864
    %v866 = vsel %vm293, %v865, 0.0
    %867 = vadd.xlane.f32.xlu0 %v866
    %v868 = vpop.xlane.xlu0 %867
    %869 = vrot.lane.b32.xlu0 %v289, 112
    %v870 = vpop.permute.xlu0 %869
    %v873 = vsel %vm293, %v865, 0
    %875 = vmatpush.msra.mxu0 0.0
    %876 = vmatpush.msra.mxu0 0.0
    %877 = vmatpush.msra.mxu0 0.0
    %878 = vmatpush.msra.mxu0 0.0
    %879 = vmatpush.msra.mxu0 0.0
    %880 = vmatpush.msra.mxu0 0.0
    %881 = vmatpush.msra.mxu0 0.0
    %882 = vmatpush.msra.mxu0 0.0
    %883 = vmatpush.msra.mxu0 0.0
    %884 = vmatpush.msra.mxu0 0.0
    %885 = vmatpush.msra.mxu0 0.0
    %886 = vmatpush.msra.mxu0 0.0
    %887 = vmatpush.msra.mxu0 0.0
    %888 = vmatpush.msra.mxu0 0.0
    %889 = vmatpush.msra.mxu0 0.0
    %890 = vmatpush.msra.mxu0 %v870
    %891 = vmatmul.f32.gmra.mxu0 %v873
    %v892 = vpop.f32.mrf.mxu0
    %v893 = vadd.f32 0.0, %v892
    %894 = vdwg.mxu0
    %v895 = vrcp.pop %v868
    %v896 = vmul.f32 %v893, %v895
    %v898 = vsel %vm293, %v896, 0
    %900 = vmatpush.msra.mxu0 0.0
    %901 = vmatpush.msra.mxu0 0.0
    %902 = vmatpush.msra.mxu0 0.0
    %903 = vmatpush.msra.mxu0 0.0
    %904 = vmatpush.msra.mxu0 0.0
    %905 = vmatpush.msra.mxu0 0.0
    %906 = vmatpush.msra.mxu0 0.0
    %907 = vmatpush.msra.mxu0 0.0
    %908 = vmatpush.msra.mxu0 0.0
    %909 = vmatpush.msra.mxu0 0.0
    %910 = vmatpush.msra.mxu0 0.0
    %911 = vmatpush.msra.mxu0 0.0
    %912 = vmatpush.msra.mxu0 0.0
    %913 = vmatpush.msra.mxu0 0.0
    %914 = vmatpush.msra.mxu0 0.0
    %915 = vmatpush.msra.mxu0 %v181
    %916 = vmatmul.f32.gmra.mxu0 %v898
    %v917 = vpop.f32.mrf.mxu0
    %v918 = vadd.f32 0.0, %v917
    %919 = vdwg.mxu0
    %v920 = vadd.f32 %v829, %v918
    %921 = vrot.lane.b32.xlu0 %v224, 104
    %v922 = vpop.permute.xlu0 %921
    %923 = vrot.lane.b32.xlu0 %v256, 104
    %v924 = vpop.permute.xlu0 %923
    %v925 = vsel %vm293, %v922, 0
    %v927 = vsel %vm293, %v924, 0
    %929 = vmatpush.xpose.msra.mxu0 0.0
    %930 = vmatpush.xpose.msra.mxu0 0.0
    %931 = vmatpush.xpose.msra.mxu0 0.0
    %932 = vmatpush.xpose.msra.mxu0 0.0
    %933 = vmatpush.xpose.msra.mxu0 0.0
    %934 = vmatpush.xpose.msra.mxu0 0.0
    %935 = vmatpush.xpose.msra.mxu0 0.0
    %936 = vmatpush.xpose.msra.mxu0 0.0
    %937 = vmatpush.xpose.msra.mxu0 0.0
    %938 = vmatpush.xpose.msra.mxu0 0.0
    %939 = vmatpush.xpose.msra.mxu0 0.0
    %940 = vmatpush.xpose.msra.mxu0 0.0
    %941 = vmatpush.xpose.msra.mxu0 0.0
    %942 = vmatpush.xpose.msra.mxu0 0.0
    %943 = vmatpush.xpose.msra.mxu0 0.0
    %944 = vmatpush.xpose.msra.mxu0 %v927
    %945 = vmatmul.f32.gmra.mxu0 %v925
    %v946 = vpop.f32.mrf.mxu0
    %v947 = vadd.f32 0.0, %v946
    %948 = vdwg.mxu0
    %v949 = vsel %vm656, -1e+09, %v947
    %v950 = vsel %vm293, %v949, -inf
    %951 = vmax.xlane.f32.xlu0 %v950
    %v952 = vpop.xlane.xlu0 %951
    %v953 = vsub.f32 %v949, %v952
    %v954 = vmul.f32 %v953, 1.442695
    %v955 = vpow.pop %v954
    %v956 = vsel %vm293, %v955, 0.0
    %957 = vadd.xlane.f32.xlu0 %v956
    %v958 = vpop.xlane.xlu0 %957
    %959 = vrot.lane.b32.xlu0 %v289, 104
    %v960 = vpop.permute.xlu0 %959
    %v963 = vsel %vm293, %v955, 0
    %965 = vmatpush.msra.mxu0 0.0
    %966 = vmatpush.msra.mxu0 0.0
    %967 = vmatpush.msra.mxu0 0.0
    %968 = vmatpush.msra.mxu0 0.0
    %969 = vmatpush.msra.mxu0 0.0
    %970 = vmatpush.msra.mxu0 0.0
    %971 = vmatpush.msra.mxu0 0.0
    %972 = vmatpush.msra.mxu0 0.0
    %973 = vmatpush.msra.mxu0 0.0
    %974 = vmatpush.msra.mxu0 0.0
    %975 = vmatpush.msra.mxu0 0.0
    %976 = vmatpush.msra.mxu0 0.0
    %977 = vmatpush.msra.mxu0 0.0
    %978 = vmatpush.msra.mxu0 0.0
    %979 = vmatpush.msra.mxu0 0.0
    %980 = vmatpush.msra.mxu0 %v960
    %981 = vmatmul.f32.gmra.mxu0 %v963
    %v982 = vpop.f32.mrf.mxu0
    %v983 = vadd.f32 0.0, %v982
    %984 = vdwg.mxu0
    %v985 = vrcp.pop %v958
    %v986 = vmul.f32 %v983, %v985
    %v988 = vsel %vm293, %v986, 0
    %990 = vmatpush.msra.mxu0 0.0
    %991 = vmatpush.msra.mxu0 0.0
    %992 = vmatpush.msra.mxu0 0.0
    %993 = vmatpush.msra.mxu0 0.0
    %994 = vmatpush.msra.mxu0 0.0
    %995 = vmatpush.msra.mxu0 0.0
    %996 = vmatpush.msra.mxu0 0.0
    %997 = vmatpush.msra.mxu0 0.0
    %998 = vmatpush.msra.mxu0 0.0
    %999 = vmatpush.msra.mxu0 0.0
    %1000 = vmatpush.msra.mxu0 0.0
    %1001 = vmatpush.msra.mxu0 0.0
    %1002 = vmatpush.msra.mxu0 0.0
    %1003 = vmatpush.msra.mxu0 0.0
    %1004 = vmatpush.msra.mxu0 0.0
    %1005 = vmatpush.msra.mxu0 %v182
    %1006 = vmatmul.f32.gmra.mxu0 %v988
    %v1007 = vpop.f32.mrf.mxu0
    %v1008 = vadd.f32 0.0, %v1007
    %1009 = vdwg.mxu0
    %v1010 = vadd.f32 %v920, %v1008
    %v1011 = vld [vmem:[%s10] sm:$0x1]
    %v1013 = vperm.slane %v1011, 0
    %v1015 = vadd.f32 %v1010, %v1013
    %1016 = vst.msk [vmem:[#allocation16 + $0x8] sm:$0xff] %vm193, %v1015
    // Predicated region
    $region82: #{tpu_custom_call.1} parent=1 // pred_check
      _
    $region83: #{tpu_custom_call.1} parent=1 // pred_check_branch
      %1018 = sbr.rel (0) target = $region85
    $region84: #{tpu_custom_call.1} parent=1 // pred_region
      %1020 = vsyncadd [#allocation4], 0
      %s1021 = sshll.u32 [#allocation16], 4
      %s1022 = int_to_ptr.vmem [resolvable:$true] %s1021
      %s1023 = sshll.u32 %s12, 4
      %s1024 = int_to_ptr.hbm [resolvable:$true] %s1023
      %1029 = dma.vmem_to_hbm [thread:$0]  %s1022, 256, %s1024, [#allocation4], 128, 128, 8
    $region85: #{tpu_custom_call.1} parent=1 // pred_fallthru
      _
    // Predicated region
    $region86: #{tpu_custom_call.1} parent=1 // pred_check
      _
    $region87: #{tpu_custom_call.1} parent=1 // pred_check_branch
      %1031 = sbr.rel (0) target = $region89
    $region88: #{tpu_custom_call.1} parent=1 // pred_region
      %1033 = dma.done [#allocation4], 256
    $region89: #{tpu_custom_call.1} parent=1 // pred_fallthru
      _
    %1034 = vsyncpa [#allocation3], 1
    %1035 = vsyncpa [#allocation6], 1
    %1036 = vsyncpa [#allocation9], 1
    %1037 = vsyncpa [#allocation12], 1
    %1038 = vsyncpa [#allocation15], 1
    %1039 = vsyncpa [#allocation4], 1

</llo_original>
